<compile_context>
chip_gen: v5e
topology: v5e:2x2
jax: 0.10.0
libtpu: 0.0.40
codegen_flags: <defaults>
</compile_context>

<pallas_src>
import functools

import jax
import jax.numpy as jnp
from jax.experimental import pallas as pl
from jax.experimental.pallas import tpu as pltpu

VMEM_SPEC = pl.BlockSpec(memory_space=pltpu.MemorySpace.VMEM)


# ----------------------------------------------------------------------------
# Kernel 1: fully fused node-level forward
# ----------------------------------------------------------------------------
def _grouped_convert(x, umask, imask, n_user, n_item):
    """convertDistribution applied independently to the user-row block and the
    item-row block of a stacked [N, F] tensor (mean / unbiased std over all
    elements of each block, exactly like torch.mean / torch.std)."""
    f = x.shape[1]

    def stats(mask, cnt):
        m = jnp.sum(x * mask) / cnt
        v = jnp.sum(((x - m) * mask) ** 2) / (cnt - 1.0)
        return m, jnp.sqrt(v)

    mu_u, sd_u = stats(umask, float(n_user * f))
    mu_i, sd_i = stats(imask, float(n_item * f))
    mean = umask * mu_u + imask * mu_i
    std = umask * sd_u + imask * sd_i
    return (x - mean) * 0.1 / std


def fused_forward_kernel(x_ref, wr_ref, br_ref, emb_ref, adj_ref,
                         w1_ref, b1_ref, w2_ref, b2_ref, out_ref,
                         *, num_users, num_items, num_layers, gcn_layers):
    n = num_users + num_items
    rows = jax.lax.broadcasted_iota(jnp.int32, (n, 1), 0)
    umask = (rows < num_users).astype(jnp.float32)
    imask = 1.0 - umask

    # ---- fusion layer (users + items batched in one pass) ----
    x1 = _grouped_convert(x_ref[...], umask, imask, num_users, num_items)
    red = jnp.dot(x1.astype(jnp.bfloat16), wr_ref[...].astype(jnp.bfloat16),
                  preferred_element_type=jnp.float32) + br_ref[...]
    conv2 = _grouped_convert(red, umask, imask, num_users, num_items)
    emb_tab = emb_ref[...]
    fused = emb_tab + conv2

    adj = adj_ref[...]                     # bf16 [N, N], resident for all layers
    chunks = [emb_tab, conv2]

    for l in range(num_layers):            # unrolled at trace time
        # LightGCN interest diffusion: mean over {e, A e, A^2 e, ...}
        cur = fused
        acc = cur
        for _ in range(gcn_layers):
            cur = jnp.dot(adj, cur.astype(jnp.bfloat16),
                          preferred_element_type=jnp.float32)
            acc = acc + cur
        interest = acc * (1.0 / float(gcn_layers + 1))

        # TODO(synk): GraphGAT (influence/citation) and GraphSage diffusion need
        # DGL message passing on NID-masked subgraphs; fall back to the
        # unmodified fusion embedding for those branches.
        other = fused

        # All 4 attention heads (u_i, u_u, i_u, i_i) as one wide matmul:
        #   [N, 3E] @ [3E, 4E]  ->  tanh  ->  [N, 4E] @ [4E, 4] (block-diag)
        att_in = jnp.concatenate([fused, interest, other], axis=1)
        h = jnp.tanh(jnp.dot(att_in, w1_ref[l],
                             preferred_element_type=jnp.float32) + b1_ref[l])
        s = jnp.dot(h, w2_ref[l], preferred_element_type=jnp.float32) + b2_ref[l]
        s = jnp.where(s > 0.0, s, 0.01 * s)            # LeakyReLU(0.01)
        e = jnp.exp(s)                                 # [N, 4]

        # users use heads (u_i, u_u); items use heads (i_u, i_i)
        att1 = jnp.where(umask > 0.0, e[:, 0:1], e[:, 2:3]) + 0.7
        att2 = jnp.where(umask > 0.0, e[:, 1:2], e[:, 3:4]) + 0.3
        a1 = att1 / (att1 + att2)
        # NOTE: faithful to the PyTorch source, where "+ 1/2 * other * a2" is a
        # standalone statement (a no-op) and thus never added.
        fused = 0.5 * fused + 0.5 * interest * a1
        chunks.append(fused)

    # single lane-dense store of the final concatenated embedding [N, E*(L+2)]
    out_ref[...] = jnp.concatenate(chunks, axis=1)


def fused_forward(x_all, wr, br, emb_all, adj_bf16, w1, b1, w2, b2,
                  *, num_users, num_layers, gcn_layers):
    n, emb = emb_all.shape
    out_w = emb * (num_layers + 2)
    kernel = functools.partial(fused_forward_kernel,
                               num_users=num_users,
                               num_items=n - num_users,
                               num_layers=num_layers,
                               gcn_layers=gcn_layers)
    return pl.pallas_call(
        kernel,
        out_shape=jax.ShapeDtypeStruct((n, out_w), jnp.float32),
        in_specs=[VMEM_SPEC] * 9,
        out_specs=VMEM_SPEC,
    )(x_all, wr, br, emb_all, adj_bf16, w1, b1, w2, b2)


# ----------------------------------------------------------------------------
# Kernel 2: edge scoring (u_dot_v), pos + neg batched, lane-dense output
# ----------------------------------------------------------------------------
def edge_score_kernel(u_ref, v_ref, o_ref):
    o_ref[...] = jnp.sum(u_ref[...] * v_ref[...], axis=-1)


def edge_scores(u_feats, v_feats):
    # u_feats / v_feats: [2, E, D]  (row 0 = positive edges, row 1 = negative)
    g, e, _ = u_feats.shape
    return pl.pallas_call(
        edge_score_kernel,
        out_shape=jax.ShapeDtypeStruct((g, e), jnp.float32),
        in_specs=[VMEM_SPEC, VMEM_SPEC],
        out_specs=VMEM_SPEC,
    )(u_feats, v_feats)


# ----------------------------------------------------------------------------
# Parameter construction / packing (glue)
# ----------------------------------------------------------------------------
def init_att_head(key, emb):
    k1, k2, k3, k4 = jax.random.split(key, 4)
    return {
        'w1': jax.random.normal(k1, (2 * emb, emb), jnp.float32) * 0.1,  # x @ w1
        'b1': jax.random.normal(k2, (emb,), jnp.float32) * 0.1,
        'w2': jax.random.normal(k3, (emb,), jnp.float32) * 0.1,          # Linear(emb, 1)
        'b2': jax.random.normal(k4, (), jnp.float32) * 0.1,
    }


def pack_att_layer(heads, emb):
    """heads = [u_i, u_u, i_u, i_i].  Pack the first linears into one [3E, 4E]
    weight (row blocks: fused | interest | other) + [1, 4E] bias, and the
    second linears into a block-diagonal [4E, 4] weight + [1, 4] bias, so all
    four heads run as one wide matmul inside the kernel."""
    w1 = jnp.zeros((3 * emb, 4 * emb), jnp.float32)
    w2 = jnp.zeros((4 * emb, 4), jnp.float32)
    b1, b2 = [], []
    for j, h in enumerate(heads):
        col = slice(j * emb, (j + 1) * emb)
        w1 = w1.at[0:emb, col].set(h['w1'][:emb])          # fused half
        r0 = emb if j in (0, 2) else 2 * emb               # interest | other half
        w1 = w1.at[r0:r0 + emb, col].set(h['w1'][emb:])
        w2 = w2.at[j * emb:(j + 1) * emb, j].set(h['w2'])
        b1.append(h['b1'])
        b2.append(h['b2'])
    return (w1, jnp.concatenate(b1).reshape(1, 4 * emb),
            w2, jnp.stack(b2).reshape(1, 4))


def init_params(key, num_users, num_items, in_feats, emb, num_layers):
    keys = jax.random.split(key, 4 + 4 * num_layers)
    params = {
        'user_emb': jax.random.normal(keys[0], (num_users, emb), jnp.float32) * 0.1,
        'item_emb': jax.random.normal(keys[1], (num_items, emb), jnp.float32) * 0.1,
        'Wr': jax.random.normal(keys[2], (in_feats, emb), jnp.float32)
              * (1.0 / jnp.sqrt(float(in_feats))),
        'br': jax.random.normal(keys[3], (1, emb), jnp.float32) * 0.01,
    }
    w1s, b1s, w2s, b2s = [], [], [], []
    for i in range(num_layers):
        base = 4 + 4 * i
        heads = [init_att_head(keys[base + j], emb) for j in range(4)]  # u_i,u_u,i_u,i_i
        w1, b1, w2, b2 = pack_att_layer(heads, emb)
        w1s.append(w1); b1s.append(b1); w2s.append(w2); b2s.append(b2)
    params['att_w1'] = jnp.stack(w1s)     # [L, 3E, 4E]
    params['att_b1'] = jnp.stack(b1s)     # [L, 1, 4E]
    params['att_w2'] = jnp.stack(w2s)     # [L, 4E, 4]
    params['att_b2'] = jnp.stack(b2s)     # [L, 1, 4]
    return params


def build_norm_adj(key, num_users, num_items, num_edges):
    # Dense version of LightGCNLayer's normalized adjacency:
    #   A[u, U+v] = 1/(out_deg(u)+1), A[U+v, u] = 1/(in_deg(v)+1), diag = 1/(deg+1)
    ku, kv = jax.random.split(key)
    u_id = jax.random.randint(ku, (num_edges,), 0, num_users)
    v_id = jax.random.randint(kv, (num_edges,), 0, num_items)
    u_deg = jnp.zeros((num_users,), jnp.float32).at[u_id].add(1.0) + 1.0
    v_deg = jnp.zeros((num_items,), jnp.float32).at[v_id].add(1.0) + 1.0
    n = num_users + num_items
    adj = jnp.zeros((n, n), jnp.float32)
    adj = adj.at[u_id, num_users + v_id].add(1.0 / u_deg[u_id])
    adj = adj.at[num_users + v_id, u_id].add(1.0 / v_deg[v_id])
    diag = jnp.concatenate([1.0 / u_deg, 1.0 / v_deg])
    adj = adj.at[jnp.arange(n), jnp.arange(n)].add(diag)
    return adj


# ----------------------------------------------------------------------------
# Forward pass (eval mode: dropout disabled)
# ----------------------------------------------------------------------------
def forward(params, x_author, x_paper, adj, pos_edges, neg_edges,
            *, num_layers, gcn_layers):
    num_users = x_author.shape[0]

    x_all = jnp.concatenate([x_author, x_paper], axis=0)
    emb_all = jnp.concatenate([params['user_emb'], params['item_emb']], axis=0)

    out_all = fused_forward(
        x_all, params['Wr'], params['br'], emb_all,
        adj.astype(jnp.bfloat16),
        params['att_w1'], params['att_b1'], params['att_w2'], params['att_b2'],
        num_users=num_users, num_layers=num_layers, gcn_layers=gcn_layers)

    user_final = out_all[:num_users]          # [U, emb*(L+2)]
    item_final = out_all[num_users:]          # [I, emb*(L+2)]

    # prediction: u_dot_v over positive / negative edges (one batched kernel)
    u_gather = jnp.stack([user_final[pos_edges[0]], user_final[neg_edges[0]]])
    v_gather = jnp.stack([item_final[pos_edges[1]], item_final[neg_edges[1]]])
    scores = edge_scores(u_gather, v_gather)  # [2, E]
    pos_score = scores[0][:, None]
    neg_score = scores[1][:, None]

    weights = (params['user_emb'], params['item_emb'])
    return pos_score, neg_score, weights, user_final, item_final


# ----------------------------------------------------------------------------
if __name__ == "__main__":
    NUM_USERS = 16      # num_nodes['author']
    NUM_ITEMS = 24      # num_nodes['paper']
    IN_FEATS = 128
    EMB = 64
    NUM_LAYERS = 2
    GCN_LAYERS = 3
    NUM_GRAPH_EDGES = 40
    NUM_SCORE_EDGES = 32

    root = jax.random.PRNGKey(0)
    k_params, k_graph, k_xa, k_xp, k_pu, k_pv, k_nu, k_nv = jax.random.split(root, 8)

    params = init_params(k_params, NUM_USERS, NUM_ITEMS, IN_FEATS, EMB, NUM_LAYERS)
    adj = build_norm_adj(k_graph, NUM_USERS, NUM_ITEMS, NUM_GRAPH_EDGES)

    x_author = jax.random.normal(k_xa, (NUM_USERS, IN_FEATS), jnp.float32)
    x_paper = jax.random.normal(k_xp, (NUM_ITEMS, IN_FEATS), jnp.float32)

    pos_edges = (jax.random.randint(k_pu, (NUM_SCORE_EDGES,), 0, NUM_USERS),
                 jax.random.randint(k_pv, (NUM_SCORE_EDGES,), 0, NUM_ITEMS))
    neg_edges = (jax.random.randint(k_nu, (NUM_SCORE_EDGES,), 0, NUM_USERS),
                 jax.random.randint(k_nv, (NUM_SCORE_EDGES,), 0, NUM_ITEMS))

    fwd = jax.jit(functools.partial(forward,
                                    num_layers=NUM_LAYERS,
                                    gcn_layers=GCN_LAYERS))
    pos_score, neg_score, weights, user_final, item_final = fwd(
        params, x_author, x_paper, adj, pos_edges, neg_edges)

    # final_*_embedding parameter buffers updated in-place in the original
    final_user_embedding = jnp.zeros((NUM_USERS, EMB * (NUM_LAYERS + 2)), jnp.float32)
    final_item_embedding = jnp.zeros((NUM_ITEMS, EMB * (NUM_LAYERS + 2)), jnp.float32)
    final_user_embedding = final_user_embedding.at[jnp.arange(NUM_USERS)].set(user_final)
    final_item_embedding = final_item_embedding.at[jnp.arange(NUM_ITEMS)].set(item_final)

    jax.block_until_ready((pos_score, neg_score, weights,
                           final_user_embedding, final_item_embedding))
    assert pos_score.shape == (NUM_SCORE_EDGES, 1)
    assert neg_score.shape == (NUM_SCORE_EDGES, 1)
    print("KERNEL_OK")
</pallas_src>

<mosaic_0001>
module attributes {stable_mosaic.version = 11 : i64} {
  func.func @fused_forward_kernel(%arg0: memref<40x128xf32, #tpu.memory_space<vmem>>, %arg1: memref<128x64xf32, #tpu.memory_space<vmem>>, %arg2: memref<1x64xf32, #tpu.memory_space<vmem>>, %arg3: memref<40x64xf32, #tpu.memory_space<vmem>>, %arg4: memref<40x40xbf16, #tpu.memory_space<vmem>>, %arg5: memref<2x192x256xf32, #tpu.memory_space<vmem>>, %arg6: memref<2x1x256xf32, #tpu.memory_space<vmem>>, %arg7: memref<2x256x4xf32, #tpu.memory_space<vmem>>, %arg8: memref<2x1x4xf32, #tpu.memory_space<vmem>>, %arg9: memref<40x256xf32, #tpu.memory_space<vmem>>) attributes {dimension_semantics = [], scalar_prefetch = 0 : i64, scratch_operands = 0 : i64, tpu.core_type = #tpu.core_type<tc>} {
    %0 = tpu.iota {dimensions = array<i32: 0>} : vector<40x1xi32>
    %c16_i32 = arith.constant 16 : i32
    %1 = vector.broadcast %c16_i32 : i32 to vector<40x1xi32>
    %2 = arith.cmpi slt, %0, %1 : vector<40x1xi32>
    %3 = arith.extui %2 : vector<40x1xi1> to vector<40x1xi32>
    %4 = arith.sitofp %3 : vector<40x1xi32> to vector<40x1xf32>
    %cst = arith.constant 1.000000e+00 : f32
    %5 = vector.broadcast %cst : f32 to vector<40x1xf32>
    %6 = arith.subf %5, %4 : vector<40x1xf32>
    %c0 = arith.constant 0 : index
    %c0_0 = arith.constant 0 : index
    %7 = vector.load %arg0[%c0, %c0_0] : memref<40x128xf32, #tpu.memory_space<vmem>>, vector<40x128xf32>
    %8 = vector.broadcast %4 : vector<40x1xf32> to vector<40x128xf32>
    %9 = arith.mulf %7, %8 : vector<40x128xf32>
    %10 = vector.shape_cast %9 : vector<40x128xf32> to vector<1x40x128xf32>
    %cst_1 = arith.constant dense<0.000000e+00> : vector<1xf32>
    %11 = vector.multi_reduction <add>, %10, %cst_1 [1, 2] : vector<1x40x128xf32> to vector<1xf32>
    %12 = vector.shape_cast %11 : vector<1xf32> to vector<1x1x1xf32>
    %13 = vector.extract %12[0, 0, 0] : f32 from vector<1x1x1xf32>
    %cst_2 = arith.constant 2.048000e+03 : f32
    %14 = arith.divf %13, %cst_2 : f32
    %15 = vector.broadcast %14 : f32 to vector<40x128xf32>
    %16 = arith.subf %7, %15 : vector<40x128xf32>
    %17 = vector.broadcast %4 : vector<40x1xf32> to vector<40x128xf32>
    %18 = arith.mulf %16, %17 : vector<40x128xf32>
    %19 = arith.mulf %18, %18 : vector<40x128xf32>
    %20 = vector.shape_cast %19 : vector<40x128xf32> to vector<1x40x128xf32>
    %cst_3 = arith.constant dense<0.000000e+00> : vector<1xf32>
    %21 = vector.multi_reduction <add>, %20, %cst_3 [1, 2] : vector<1x40x128xf32> to vector<1xf32>
    %22 = vector.shape_cast %21 : vector<1xf32> to vector<1x1x1xf32>
    %23 = vector.extract %22[0, 0, 0] : f32 from vector<1x1x1xf32>
    %cst_4 = arith.constant 2.047000e+03 : f32
    %24 = arith.divf %23, %cst_4 : f32
    %25 = math.sqrt %24 : f32
    %26 = vector.broadcast %6 : vector<40x1xf32> to vector<40x128xf32>
    %27 = arith.mulf %7, %26 : vector<40x128xf32>
    %28 = vector.shape_cast %27 : vector<40x128xf32> to vector<1x40x128xf32>
    %cst_5 = arith.constant dense<0.000000e+00> : vector<1xf32>
    %29 = vector.multi_reduction <add>, %28, %cst_5 [1, 2] : vector<1x40x128xf32> to vector<1xf32>
    %30 = vector.shape_cast %29 : vector<1xf32> to vector<1x1x1xf32>
    %31 = vector.extract %30[0, 0, 0] : f32 from vector<1x1x1xf32>
    %cst_6 = arith.constant 3.072000e+03 : f32
    %32 = arith.divf %31, %cst_6 : f32
    %33 = vector.broadcast %32 : f32 to vector<40x128xf32>
    %34 = arith.subf %7, %33 : vector<40x128xf32>
    %35 = vector.broadcast %6 : vector<40x1xf32> to vector<40x128xf32>
    %36 = arith.mulf %34, %35 : vector<40x128xf32>
    %37 = arith.mulf %36, %36 : vector<40x128xf32>
    %38 = vector.shape_cast %37 : vector<40x128xf32> to vector<1x40x128xf32>
    %cst_7 = arith.constant dense<0.000000e+00> : vector<1xf32>
    %39 = vector.multi_reduction <add>, %38, %cst_7 [1, 2] : vector<1x40x128xf32> to vector<1xf32>
    %40 = vector.shape_cast %39 : vector<1xf32> to vector<1x1x1xf32>
    %41 = vector.extract %40[0, 0, 0] : f32 from vector<1x1x1xf32>
    %cst_8 = arith.constant 3.071000e+03 : f32
    %42 = arith.divf %41, %cst_8 : f32
    %43 = math.sqrt %42 : f32
    %44 = vector.broadcast %14 : f32 to vector<40x1xf32>
    %45 = arith.mulf %4, %44 : vector<40x1xf32>
    %46 = vector.broadcast %32 : f32 to vector<40x1xf32>
    %47 = arith.mulf %6, %46 : vector<40x1xf32>
    %48 = arith.addf %45, %47 : vector<40x1xf32>
    %49 = vector.broadcast %25 : f32 to vector<40x1xf32>
    %50 = arith.mulf %4, %49 : vector<40x1xf32>
    %51 = vector.broadcast %43 : f32 to vector<40x1xf32>
    %52 = arith.mulf %6, %51 : vector<40x1xf32>
    %53 = arith.addf %50, %52 : vector<40x1xf32>
    %54 = vector.broadcast %48 : vector<40x1xf32> to vector<40x128xf32>
    %55 = arith.subf %7, %54 : vector<40x128xf32>
    %cst_9 = arith.constant 1.000000e-01 : f32
    %56 = vector.broadcast %cst_9 : f32 to vector<40x128xf32>
    %57 = arith.mulf %55, %56 : vector<40x128xf32>
    %58 = vector.broadcast %53 : vector<40x1xf32> to vector<40x128xf32>
    %59 = arith.divf %57, %58 : vector<40x128xf32>
    %60 = arith.truncf %59 : vector<40x128xf32> to vector<40x128xbf16>
    %c0_10 = arith.constant 0 : index
    %c0_11 = arith.constant 0 : index
    %61 = vector.load %arg1[%c0_10, %c0_11] : memref<128x64xf32, #tpu.memory_space<vmem>>, vector<128x64xf32>
    %62 = arith.truncf %61 : vector<128x64xf32> to vector<128x64xbf16>
    %cst_12 = arith.constant dense<0.000000e+00> : vector<40x64xf32>
    %63 = tpu.matmul %60, %62, %cst_12 {dimension_numbers = #tpu.dot_dimension_numbers<[1], [0], [0], [1], [0, 0, 1, 1], [], []>} : vector<40x128xbf16>, vector<128x64xbf16>, vector<40x64xf32> -> vector<40x64xf32>
    %c0_13 = arith.constant 0 : index
    %c0_14 = arith.constant 0 : index
    %64 = vector.load %arg2[%c0_13, %c0_14] : memref<1x64xf32, #tpu.memory_space<vmem>>, vector<1x64xf32>
    %65 = vector.broadcast %64 : vector<1x64xf32> to vector<40x64xf32>
    %66 = arith.addf %63, %65 : vector<40x64xf32>
    %67 = vector.broadcast %4 : vector<40x1xf32> to vector<40x64xf32>
    %68 = arith.mulf %66, %67 : vector<40x64xf32>
    %69 = vector.shape_cast %68 : vector<40x64xf32> to vector<1x40x64xf32>
    %cst_15 = arith.constant dense<0.000000e+00> : vector<1xf32>
    %70 = vector.multi_reduction <add>, %69, %cst_15 [1, 2] : vector<1x40x64xf32> to vector<1xf32>
    %71 = vector.shape_cast %70 : vector<1xf32> to vector<1x1x1xf32>
    %72 = vector.extract %71[0, 0, 0] : f32 from vector<1x1x1xf32>
    %cst_16 = arith.constant 1.024000e+03 : f32
    %73 = arith.divf %72, %cst_16 : f32
    %74 = vector.broadcast %73 : f32 to vector<40x64xf32>
    %75 = arith.subf %66, %74 : vector<40x64xf32>
    %76 = vector.broadcast %4 : vector<40x1xf32> to vector<40x64xf32>
    %77 = arith.mulf %75, %76 : vector<40x64xf32>
    %78 = arith.mulf %77, %77 : vector<40x64xf32>
    %79 = vector.shape_cast %78 : vector<40x64xf32> to vector<1x40x64xf32>
    %cst_17 = arith.constant dense<0.000000e+00> : vector<1xf32>
    %80 = vector.multi_reduction <add>, %79, %cst_17 [1, 2] : vector<1x40x64xf32> to vector<1xf32>
    %81 = vector.shape_cast %80 : vector<1xf32> to vector<1x1x1xf32>
    %82 = vector.extract %81[0, 0, 0] : f32 from vector<1x1x1xf32>
    %cst_18 = arith.constant 1.023000e+03 : f32
    %83 = arith.divf %82, %cst_18 : f32
    %84 = math.sqrt %83 : f32
    %85 = vector.broadcast %6 : vector<40x1xf32> to vector<40x64xf32>
    %86 = arith.mulf %66, %85 : vector<40x64xf32>
    %87 = vector.shape_cast %86 : vector<40x64xf32> to vector<1x40x64xf32>
    %cst_19 = arith.constant dense<0.000000e+00> : vector<1xf32>
    %88 = vector.multi_reduction <add>, %87, %cst_19 [1, 2] : vector<1x40x64xf32> to vector<1xf32>
    %89 = vector.shape_cast %88 : vector<1xf32> to vector<1x1x1xf32>
    %90 = vector.extract %89[0, 0, 0] : f32 from vector<1x1x1xf32>
    %cst_20 = arith.constant 1.536000e+03 : f32
    %91 = arith.divf %90, %cst_20 : f32
    %92 = vector.broadcast %91 : f32 to vector<40x64xf32>
    %93 = arith.subf %66, %92 : vector<40x64xf32>
    %94 = vector.broadcast %6 : vector<40x1xf32> to vector<40x64xf32>
    %95 = arith.mulf %93, %94 : vector<40x64xf32>
    %96 = arith.mulf %95, %95 : vector<40x64xf32>
    %97 = vector.shape_cast %96 : vector<40x64xf32> to vector<1x40x64xf32>
    %cst_21 = arith.constant dense<0.000000e+00> : vector<1xf32>
    %98 = vector.multi_reduction <add>, %97, %cst_21 [1, 2] : vector<1x40x64xf32> to vector<1xf32>
    %99 = vector.shape_cast %98 : vector<1xf32> to vector<1x1x1xf32>
    %100 = vector.extract %99[0, 0, 0] : f32 from vector<1x1x1xf32>
    %cst_22 = arith.constant 1.535000e+03 : f32
    %101 = arith.divf %100, %cst_22 : f32
    %102 = math.sqrt %101 : f32
    %103 = vector.broadcast %73 : f32 to vector<40x1xf32>
    %104 = arith.mulf %4, %103 : vector<40x1xf32>
    %105 = vector.broadcast %91 : f32 to vector<40x1xf32>
    %106 = arith.mulf %6, %105 : vector<40x1xf32>
    %107 = arith.addf %104, %106 : vector<40x1xf32>
    %108 = vector.broadcast %84 : f32 to vector<40x1xf32>
    %109 = arith.mulf %4, %108 : vector<40x1xf32>
    %110 = vector.broadcast %102 : f32 to vector<40x1xf32>
    %111 = arith.mulf %6, %110 : vector<40x1xf32>
    %112 = arith.addf %109, %111 : vector<40x1xf32>
    %113 = vector.broadcast %107 : vector<40x1xf32> to vector<40x64xf32>
    %114 = arith.subf %66, %113 : vector<40x64xf32>
    %cst_23 = arith.constant 1.000000e-01 : f32
    %115 = vector.broadcast %cst_23 : f32 to vector<40x64xf32>
    %116 = arith.mulf %114, %115 : vector<40x64xf32>
    %117 = vector.broadcast %112 : vector<40x1xf32> to vector<40x64xf32>
    %118 = arith.divf %116, %117 : vector<40x64xf32>
    %c0_24 = arith.constant 0 : index
    %c0_25 = arith.constant 0 : index
    %119 = vector.load %arg3[%c0_24, %c0_25] : memref<40x64xf32, #tpu.memory_space<vmem>>, vector<40x64xf32>
    %120 = arith.addf %119, %118 : vector<40x64xf32>
    %c0_26 = arith.constant 0 : index
    %c0_27 = arith.constant 0 : index
    %121 = vector.load %arg4[%c0_26, %c0_27] : memref<40x40xbf16, #tpu.memory_space<vmem>>, vector<40x40xbf16>
    %122 = arith.truncf %120 : vector<40x64xf32> to vector<40x64xbf16>
    %cst_28 = arith.constant dense<0.000000e+00> : vector<40x64xf32>
    %123 = tpu.matmul %121, %122, %cst_28 {dimension_numbers = #tpu.dot_dimension_numbers<[1], [0], [0], [1], [0, 0, 1, 1], [], []>} : vector<40x40xbf16>, vector<40x64xbf16>, vector<40x64xf32> -> vector<40x64xf32>
    %124 = arith.addf %120, %123 : vector<40x64xf32>
    %125 = arith.truncf %123 : vector<40x64xf32> to vector<40x64xbf16>
    %cst_29 = arith.constant dense<0.000000e+00> : vector<40x64xf32>
    %126 = tpu.matmul %121, %125, %cst_29 {dimension_numbers = #tpu.dot_dimension_numbers<[1], [0], [0], [1], [0, 0, 1, 1], [], []>} : vector<40x40xbf16>, vector<40x64xbf16>, vector<40x64xf32> -> vector<40x64xf32>
    %127 = arith.addf %124, %126 : vector<40x64xf32>
    %128 = arith.truncf %126 : vector<40x64xf32> to vector<40x64xbf16>
    %cst_30 = arith.constant dense<0.000000e+00> : vector<40x64xf32>
    %129 = tpu.matmul %121, %128, %cst_30 {dimension_numbers = #tpu.dot_dimension_numbers<[1], [0], [0], [1], [0, 0, 1, 1], [], []>} : vector<40x40xbf16>, vector<40x64xbf16>, vector<40x64xf32> -> vector<40x64xf32>
    %130 = arith.addf %127, %129 : vector<40x64xf32>
    %cst_31 = arith.constant 2.500000e-01 : f32
    %131 = vector.broadcast %cst_31 : f32 to vector<40x64xf32>
    %132 = arith.mulf %130, %131 : vector<40x64xf32>
    %133 = tpu.concatenate %120, %132, %120 in 1 : vector<40x64xf32>, vector<40x64xf32>, vector<40x64xf32> -> vector<40x192xf32>
    %c0_32 = arith.constant 0 : index
    %c0_33 = arith.constant 0 : index
    %c0_34 = arith.constant 0 : index
    %134 = vector.load %arg5[%c0_32, %c0_33, %c0_34] : memref<2x192x256xf32, #tpu.memory_space<vmem>>, vector<1x192x256xf32>
    %135 = vector.shape_cast %134 : vector<1x192x256xf32> to vector<192x256xf32>
    %cst_35 = arith.constant dense<0.000000e+00> : vector<40x256xf32>
    %136 = tpu.matmul %133, %135, %cst_35 {dimension_numbers = #tpu.dot_dimension_numbers<[1], [0], [0], [1], [0, 0, 1, 1], [], []>} : vector<40x192xf32>, vector<192x256xf32>, vector<40x256xf32> -> vector<40x256xf32>
    %c0_36 = arith.constant 0 : index
    %c0_37 = arith.constant 0 : index
    %c0_38 = arith.constant 0 : index
    %137 = vector.load %arg6[%c0_36, %c0_37, %c0_38] : memref<2x1x256xf32, #tpu.memory_space<vmem>>, vector<1x1x256xf32>
    %138 = vector.shape_cast %137 : vector<1x1x256xf32> to vector<1x256xf32>
    %139 = vector.broadcast %138 : vector<1x256xf32> to vector<40x256xf32>
    %140 = arith.addf %136, %139 : vector<40x256xf32>
    %141 = math.tanh %140 : vector<40x256xf32>
    %c0_39 = arith.constant 0 : index
    %c0_40 = arith.constant 0 : index
    %c0_41 = arith.constant 0 : index
    %142 = vector.load %arg7[%c0_39, %c0_40, %c0_41] : memref<2x256x4xf32, #tpu.memory_space<vmem>>, vector<1x256x4xf32>
    %143 = vector.shape_cast %142 : vector<1x256x4xf32> to vector<256x4xf32>
    %cst_42 = arith.constant dense<0.000000e+00> : vector<40x4xf32>
    %144 = tpu.matmul %141, %143, %cst_42 {dimension_numbers = #tpu.dot_dimension_numbers<[1], [0], [0], [1], [0, 0, 1, 1], [], []>} : vector<40x256xf32>, vector<256x4xf32>, vector<40x4xf32> -> vector<40x4xf32>
    %c0_43 = arith.constant 0 : index
    %c0_44 = arith.constant 0 : index
    %c0_45 = arith.constant 0 : index
    %145 = vector.load %arg8[%c0_43, %c0_44, %c0_45] : memref<2x1x4xf32, #tpu.memory_space<vmem>>, vector<1x1x4xf32>
    %146 = vector.shape_cast %145 : vector<1x1x4xf32> to vector<1x4xf32>
    %147 = vector.broadcast %146 : vector<1x4xf32> to vector<40x4xf32>
    %148 = arith.addf %144, %147 : vector<40x4xf32>
    %cst_46 = arith.constant 0.000000e+00 : f32
    %149 = vector.broadcast %cst_46 : f32 to vector<40x4xf32>
    %150 = arith.cmpf ogt, %148, %149 : vector<40x4xf32>
    %cst_47 = arith.constant 0.00999999977 : f32
    %151 = vector.broadcast %cst_47 : f32 to vector<40x4xf32>
    %152 = arith.mulf %151, %148 : vector<40x4xf32>
    %153 = arith.select %150, %148, %152 : vector<40x4xi1>, vector<40x4xf32>
    %154 = math.exp %153 : vector<40x4xf32>
    %cst_48 = arith.constant 0.000000e+00 : f32
    %155 = vector.broadcast %cst_48 : f32 to vector<40x1xf32>
    %156 = arith.cmpf ogt, %4, %155 : vector<40x1xf32>
    %157 = vector.extract_strided_slice %154 {offsets = [0, 0], sizes = [40, 1], strides = [1, 1]} : vector<40x4xf32> to vector<40x1xf32>
    %158 = vector.extract_strided_slice %154 {offsets = [0, 2], sizes = [40, 1], strides = [1, 1]} : vector<40x4xf32> to vector<40x1xf32>
    %159 = arith.select %156, %157, %158 : vector<40x1xi1>, vector<40x1xf32>
    %cst_49 = arith.constant 0.699999988 : f32
    %160 = vector.broadcast %cst_49 : f32 to vector<40x1xf32>
    %161 = arith.addf %159, %160 : vector<40x1xf32>
    %cst_50 = arith.constant 0.000000e+00 : f32
    %162 = vector.broadcast %cst_50 : f32 to vector<40x1xf32>
    %163 = arith.cmpf ogt, %4, %162 : vector<40x1xf32>
    %164 = vector.extract_strided_slice %154 {offsets = [0, 1], sizes = [40, 1], strides = [1, 1]} : vector<40x4xf32> to vector<40x1xf32>
    %165 = vector.extract_strided_slice %154 {offsets = [0, 3], sizes = [40, 1], strides = [1, 1]} : vector<40x4xf32> to vector<40x1xf32>
    %166 = arith.select %163, %164, %165 : vector<40x1xi1>, vector<40x1xf32>
    %cst_51 = arith.constant 3.000000e-01 : f32
    %167 = vector.broadcast %cst_51 : f32 to vector<40x1xf32>
    %168 = arith.addf %166, %167 : vector<40x1xf32>
    %169 = arith.addf %161, %168 : vector<40x1xf32>
    %170 = arith.divf %161, %169 : vector<40x1xf32>
    %cst_52 = arith.constant 5.000000e-01 : f32
    %171 = vector.broadcast %cst_52 : f32 to vector<40x64xf32>
    %172 = arith.mulf %171, %120 : vector<40x64xf32>
    %cst_53 = arith.constant 5.000000e-01 : f32
    %173 = vector.broadcast %cst_53 : f32 to vector<40x64xf32>
    %174 = arith.mulf %173, %132 : vector<40x64xf32>
    %175 = vector.broadcast %170 : vector<40x1xf32> to vector<40x64xf32>
    %176 = arith.mulf %174, %175 : vector<40x64xf32>
    %177 = arith.addf %172, %176 : vector<40x64xf32>
    %178 = arith.truncf %177 : vector<40x64xf32> to vector<40x64xbf16>
    %cst_54 = arith.constant dense<0.000000e+00> : vector<40x64xf32>
    %179 = tpu.matmul %121, %178, %cst_54 {dimension_numbers = #tpu.dot_dimension_numbers<[1], [0], [0], [1], [0, 0, 1, 1], [], []>} : vector<40x40xbf16>, vector<40x64xbf16>, vector<40x64xf32> -> vector<40x64xf32>
    %180 = arith.addf %177, %179 : vector<40x64xf32>
    %181 = arith.truncf %179 : vector<40x64xf32> to vector<40x64xbf16>
    %cst_55 = arith.constant dense<0.000000e+00> : vector<40x64xf32>
    %182 = tpu.matmul %121, %181, %cst_55 {dimension_numbers = #tpu.dot_dimension_numbers<[1], [0], [0], [1], [0, 0, 1, 1], [], []>} : vector<40x40xbf16>, vector<40x64xbf16>, vector<40x64xf32> -> vector<40x64xf32>
    %183 = arith.addf %180, %182 : vector<40x64xf32>
    %184 = arith.truncf %182 : vector<40x64xf32> to vector<40x64xbf16>
    %cst_56 = arith.constant dense<0.000000e+00> : vector<40x64xf32>
    %185 = tpu.matmul %121, %184, %cst_56 {dimension_numbers = #tpu.dot_dimension_numbers<[1], [0], [0], [1], [0, 0, 1, 1], [], []>} : vector<40x40xbf16>, vector<40x64xbf16>, vector<40x64xf32> -> vector<40x64xf32>
    %186 = arith.addf %183, %185 : vector<40x64xf32>
    %cst_57 = arith.constant 2.500000e-01 : f32
    %187 = vector.broadcast %cst_57 : f32 to vector<40x64xf32>
    %188 = arith.mulf %186, %187 : vector<40x64xf32>
    %189 = tpu.concatenate %177, %188, %177 in 1 : vector<40x64xf32>, vector<40x64xf32>, vector<40x64xf32> -> vector<40x192xf32>
    %c1 = arith.constant 1 : index
    %c0_58 = arith.constant 0 : index
    %c0_59 = arith.constant 0 : index
    %190 = vector.load %arg5[%c1, %c0_58, %c0_59] : memref<2x192x256xf32, #tpu.memory_space<vmem>>, vector<1x192x256xf32>
    %191 = vector.shape_cast %190 : vector<1x192x256xf32> to vector<192x256xf32>
    %cst_60 = arith.constant dense<0.000000e+00> : vector<40x256xf32>
    %192 = tpu.matmul %189, %191, %cst_60 {dimension_numbers = #tpu.dot_dimension_numbers<[1], [0], [0], [1], [0, 0, 1, 1], [], []>} : vector<40x192xf32>, vector<192x256xf32>, vector<40x256xf32> -> vector<40x256xf32>
    %c1_61 = arith.constant 1 : index
    %c0_62 = arith.constant 0 : index
    %c0_63 = arith.constant 0 : index
    %193 = vector.load %arg6[%c1_61, %c0_62, %c0_63] : memref<2x1x256xf32, #tpu.memory_space<vmem>>, vector<1x1x256xf32>
    %194 = vector.shape_cast %193 : vector<1x1x256xf32> to vector<1x256xf32>
    %195 = vector.broadcast %194 : vector<1x256xf32> to vector<40x256xf32>
    %196 = arith.addf %192, %195 : vector<40x256xf32>
    %197 = math.tanh %196 : vector<40x256xf32>
    %c1_64 = arith.constant 1 : index
    %c0_65 = arith.constant 0 : index
    %c0_66 = arith.constant 0 : index
    %198 = vector.load %arg7[%c1_64, %c0_65, %c0_66] : memref<2x256x4xf32, #tpu.memory_space<vmem>>, vector<1x256x4xf32>
    %199 = vector.shape_cast %198 : vector<1x256x4xf32> to vector<256x4xf32>
    %cst_67 = arith.constant dense<0.000000e+00> : vector<40x4xf32>
    %200 = tpu.matmul %197, %199, %cst_67 {dimension_numbers = #tpu.dot_dimension_numbers<[1], [0], [0], [1], [0, 0, 1, 1], [], []>} : vector<40x256xf32>, vector<256x4xf32>, vector<40x4xf32> -> vector<40x4xf32>
    %c1_68 = arith.constant 1 : index
    %c0_69 = arith.constant 0 : index
    %c0_70 = arith.constant 0 : index
    %201 = vector.load %arg8[%c1_68, %c0_69, %c0_70] : memref<2x1x4xf32, #tpu.memory_space<vmem>>, vector<1x1x4xf32>
    %202 = vector.shape_cast %201 : vector<1x1x4xf32> to vector<1x4xf32>
    %203 = vector.broadcast %202 : vector<1x4xf32> to vector<40x4xf32>
    %204 = arith.addf %200, %203 : vector<40x4xf32>
    %cst_71 = arith.constant 0.000000e+00 : f32
    %205 = vector.broadcast %cst_71 : f32 to vector<40x4xf32>
    %206 = arith.cmpf ogt, %204, %205 : vector<40x4xf32>
    %cst_72 = arith.constant 0.00999999977 : f32
    %207 = vector.broadcast %cst_72 : f32 to vector<40x4xf32>
    %208 = arith.mulf %207, %204 : vector<40x4xf32>
    %209 = arith.select %206, %204, %208 : vector<40x4xi1>, vector<40x4xf32>
    %210 = math.exp %209 : vector<40x4xf32>
    %cst_73 = arith.constant 0.000000e+00 : f32
    %211 = vector.broadcast %cst_73 : f32 to vector<40x1xf32>
    %212 = arith.cmpf ogt, %4, %211 : vector<40x1xf32>
    %213 = vector.extract_strided_slice %210 {offsets = [0, 0], sizes = [40, 1], strides = [1, 1]} : vector<40x4xf32> to vector<40x1xf32>
    %214 = vector.extract_strided_slice %210 {offsets = [0, 2], sizes = [40, 1], strides = [1, 1]} : vector<40x4xf32> to vector<40x1xf32>
    %215 = arith.select %212, %213, %214 : vector<40x1xi1>, vector<40x1xf32>
    %cst_74 = arith.constant 0.699999988 : f32
    %216 = vector.broadcast %cst_74 : f32 to vector<40x1xf32>
    %217 = arith.addf %215, %216 : vector<40x1xf32>
    %cst_75 = arith.constant 0.000000e+00 : f32
    %218 = vector.broadcast %cst_75 : f32 to vector<40x1xf32>
    %219 = arith.cmpf ogt, %4, %218 : vector<40x1xf32>
    %220 = vector.extract_strided_slice %210 {offsets = [0, 1], sizes = [40, 1], strides = [1, 1]} : vector<40x4xf32> to vector<40x1xf32>
    %221 = vector.extract_strided_slice %210 {offsets = [0, 3], sizes = [40, 1], strides = [1, 1]} : vector<40x4xf32> to vector<40x1xf32>
    %222 = arith.select %219, %220, %221 : vector<40x1xi1>, vector<40x1xf32>
    %cst_76 = arith.constant 3.000000e-01 : f32
    %223 = vector.broadcast %cst_76 : f32 to vector<40x1xf32>
    %224 = arith.addf %222, %223 : vector<40x1xf32>
    %225 = arith.addf %217, %224 : vector<40x1xf32>
    %226 = arith.divf %217, %225 : vector<40x1xf32>
    %cst_77 = arith.constant 5.000000e-01 : f32
    %227 = vector.broadcast %cst_77 : f32 to vector<40x64xf32>
    %228 = arith.mulf %227, %177 : vector<40x64xf32>
    %cst_78 = arith.constant 5.000000e-01 : f32
    %229 = vector.broadcast %cst_78 : f32 to vector<40x64xf32>
    %230 = arith.mulf %229, %188 : vector<40x64xf32>
    %231 = vector.broadcast %226 : vector<40x1xf32> to vector<40x64xf32>
    %232 = arith.mulf %230, %231 : vector<40x64xf32>
    %233 = arith.addf %228, %232 : vector<40x64xf32>
    %234 = tpu.concatenate %119, %118, %177, %233 in 1 : vector<40x64xf32>, vector<40x64xf32>, vector<40x64xf32>, vector<40x64xf32> -> vector<40x256xf32>
    %c0_79 = arith.constant 0 : index
    %c0_80 = arith.constant 0 : index
    %235 = vector.load %arg9[%c0_79, %c0_80] : memref<40x256xf32, #tpu.memory_space<vmem>>, vector<40x256xf32>
    tpu.vector_store %arg9[%c0_79, %c0_80], %234 {strides = array<i32>} : memref<40x256xf32, #tpu.memory_space<vmem>>, vector<40x256xf32>,
    return
  }
}

module attributes {stable_mosaic.version = 11 : i64} {
  func.func @edge_score_kernel(%arg0: memref<2x32x256xf32, #tpu.memory_space<vmem>>, %arg1: memref<2x32x256xf32, #tpu.memory_space<vmem>>, %arg2: memref<2x32xf32, #tpu.memory_space<vmem>>) attributes {dimension_semantics = [], scalar_prefetch = 0 : i64, scratch_operands = 0 : i64, tpu.core_type = #tpu.core_type<tc>} {
    %c0 = arith.constant 0 : index
    %c0_0 = arith.constant 0 : index
    %c0_1 = arith.constant 0 : index
    %0 = vector.load %arg0[%c0, %c0_0, %c0_1] : memref<2x32x256xf32, #tpu.memory_space<vmem>>, vector<2x32x256xf32>
    %c0_2 = arith.constant 0 : index
    %c0_3 = arith.constant 0 : index
    %c0_4 = arith.constant 0 : index
    %1 = vector.load %arg1[%c0_2, %c0_3, %c0_4] : memref<2x32x256xf32, #tpu.memory_space<vmem>>, vector<2x32x256xf32>
    %2 = arith.mulf %0, %1 : vector<2x32x256xf32>
    %cst = arith.constant dense<0.000000e+00> : vector<2x32xf32>
    %3 = vector.multi_reduction <add>, %2, %cst [2] : vector<2x32x256xf32> to vector<2x32xf32>
    %c0_5 = arith.constant 0 : index
    %c0_6 = arith.constant 0 : index
    %4 = vector.load %arg2[%c0_5, %c0_6] : memref<2x32xf32, #tpu.memory_space<vmem>>, vector<2x32xf32>
    tpu.vector_store %arg2[%c0_5, %c0_6], %3 {strides = array<i32>} : memref<2x32xf32, #tpu.memory_space<vmem>>, vector<2x32xf32>,
    return
  }
}

</mosaic_0001>

<llo_original>
// kernel: forward.3
$region0: #{forward.3}
  #allocation0 [shape = 'u32[]', space=smem, size = 0x4, offset = 0x4, fixed_abs, tag = 'smem constant byte address 0x4 - core index']
  #allocation1 [shape = 'u32[72,128]{1,0:T(1,128)}', space=vmem, size = 0x9000, scoped, tag = 'internal scratch']
  %s0 = inlined_call_operand.vmem [shape: f32[2,32,256], index: 0, kind: input, shape index: {}]
  %s1 = inlined_call_operand.vmem [shape: f32[2,32,256], index: 1, kind: input, shape index: {}]
  %s2 = inlined_call_operand.vmem [shape: f32[2,32], index: 2, kind: output, shape index: {}]
  %s3 = sld [smem:[#allocation0]]
  $region18: #{forward.3} parent=0
    _
  %s5 = ssub.s32 1, %s3
  %s6 = scalar_select 0, %s5, %s3
  // Predicated region
  $region2: #{forward.3} parent=0 // pred_check
    _
  $region3: #{forward.3} parent=0 // pred_check_branch
    %8 = sbr.rel (0) target = $region5
  $region4: #{forward.3} parent=0 // pred_region
    _
  $region5: #{forward.3} parent=0 // pred_fallthru
    _
  // Predicated region
  $region6: #{forward.3} parent=0 // pred_check
    _
  $region7: #{forward.3} parent=0 // pred_check_branch
    %10 = sbr.rel (0) target = $region9
  $region8: #{forward.3} parent=0 // pred_region
    _
  $region9: #{forward.3} parent=0 // pred_fallthru
    _
  %v11 = vld [vmem:[%s0] sm:$0xff]
  %v12 = vld [vmem:[%s0 + $0x8] sm:$0xff]
  %v13 = vld [vmem:[%s0 + $0x10] sm:$0xff]
  %v14 = vld [vmem:[%s0 + $0x18] sm:$0xff]
  %v15 = vld [vmem:[%s0 + $0x20] sm:$0xff]
  %v16 = vld [vmem:[%s0 + $0x28] sm:$0xff]
  %v17 = vld [vmem:[%s0 + $0x30] sm:$0xff]
  %v18 = vld [vmem:[%s0 + $0x38] sm:$0xff]
  %v19 = vld [vmem:[%s0 + $0x40] sm:$0xff]
  %v20 = vld [vmem:[%s0 + $0x48] sm:$0xff]
  %v21 = vld [vmem:[%s0 + $0x50] sm:$0xff]
  %v22 = vld [vmem:[%s0 + $0x58] sm:$0xff]
  %v23 = vld [vmem:[%s0 + $0x60] sm:$0xff]
  %v24 = vld [vmem:[%s0 + $0x68] sm:$0xff]
  %v25 = vld [vmem:[%s0 + $0x70] sm:$0xff]
  %v26 = vld [vmem:[%s0 + $0x78] sm:$0xff]
  %v27 = vld [vmem:[%s1] sm:$0xff]
  %v28 = vld [vmem:[%s1 + $0x8] sm:$0xff]
  %v29 = vld [vmem:[%s1 + $0x10] sm:$0xff]
  %v30 = vld [vmem:[%s1 + $0x18] sm:$0xff]
  %v31 = vld [vmem:[%s1 + $0x20] sm:$0xff]
  %v32 = vld [vmem:[%s1 + $0x28] sm:$0xff]
  %v33 = vld [vmem:[%s1 + $0x30] sm:$0xff]
  %v34 = vld [vmem:[%s1 + $0x38] sm:$0xff]
  %v35 = vld [vmem:[%s1 + $0x40] sm:$0xff]
  %v36 = vld [vmem:[%s1 + $0x48] sm:$0xff]
  %v37 = vld [vmem:[%s1 + $0x50] sm:$0xff]
  %v38 = vld [vmem:[%s1 + $0x58] sm:$0xff]
  %v39 = vld [vmem:[%s1 + $0x60] sm:$0xff]
  %v40 = vld [vmem:[%s1 + $0x68] sm:$0xff]
  %v41 = vld [vmem:[%s1 + $0x70] sm:$0xff]
  %v42 = vld [vmem:[%s1 + $0x78] sm:$0xff]
  %v43 = vmul.f32 %v11, %v27
  %v44 = vmul.f32 %v12, %v28
  %v45 = vmul.f32 %v13, %v29
  %v46 = vmul.f32 %v14, %v30
  %v47 = vmul.f32 %v15, %v31
  %v48 = vmul.f32 %v16, %v32
  %v49 = vmul.f32 %v17, %v33
  %v50 = vmul.f32 %v18, %v34
  %v51 = vmul.f32 %v19, %v35
  %v52 = vmul.f32 %v20, %v36
  %v53 = vmul.f32 %v21, %v37
  %v54 = vmul.f32 %v22, %v38
  %v55 = vmul.f32 %v23, %v39
  %v56 = vmul.f32 %v24, %v40
  %v57 = vmul.f32 %v25, %v41
  %v58 = vmul.f32 %v26, %v42
  %v59 = vadd.f32 %v43, %v44
  %60 = vadd.xlane.f32.xlu0 %v59
  %v61 = vpop.xlane.xlu0 %60
  %v62 = vadd.f32 %v45, %v46
  %63 = vadd.xlane.f32.xlu0 %v62
  %v64 = vpop.xlane.xlu0 %63
  %v65 = vadd.f32 %v47, %v48
  %66 = vadd.xlane.f32.xlu0 %v65
  %v67 = vpop.xlane.xlu0 %66
  %v68 = vadd.f32 %v49, %v50
  %69 = vadd.xlane.f32.xlu0 %v68
  %v70 = vpop.xlane.xlu0 %69
  %v71 = vadd.f32 %v51, %v52
  %72 = vadd.xlane.f32.xlu0 %v71
  %v73 = vpop.xlane.xlu0 %72
  %v74 = vadd.f32 %v53, %v54
  %75 = vadd.xlane.f32.xlu0 %v74
  %v76 = vpop.xlane.xlu0 %75
  %v77 = vadd.f32 %v55, %v56
  %78 = vadd.xlane.f32.xlu0 %v77
  %v79 = vpop.xlane.xlu0 %78
  %v80 = vadd.f32 %v57, %v58
  %81 = vadd.xlane.f32.xlu0 %v80
  %v82 = vpop.xlane.xlu0 %81
  %v91 = vlaneseq
  %v92 = vand.u32 %v91, 127
  %v93 = vperm.slane %v61, %v92
  %v94 = vadd.s32 %v92, 4294967288
  %v95 = vperm.slane %v64, %v94
  %vm96 = vcmask 130112
  %v97 = vsel %vm96, %v95, %v93
  %v98 = vadd.s32 %v92, 4294967280
  %v99 = vperm.slane %v67, %v98
  %vm100 = vcmask 195712
  %v101 = vsel %vm100, %v99, %v97
  %v102 = vadd.s32 %v92, 4294967272
  %v103 = vperm.slane %v70, %v102
  %vm104 = vcmask 261312
  %v105 = vsel %vm104, %v103, %v101
  %v106 = vperm.slane %v73, %v92
  %v107 = vperm.slane %v76, %v94
  %v108 = vsel %vm96, %v107, %v106
  %v109 = vperm.slane %v79, %v98
  %v110 = vsel %vm100, %v109, %v108
  %v111 = vperm.slane %v82, %v102
  %v112 = vsel %vm104, %v111, %v110
  %vm113 = vcmask 1041409
  %v114 = vsel %vm113, %v112, %v105
  %vm116 = vcmask 254976
  %117 = vst.msk [vmem:[%s2] sm:$0x3] %vm116, %v114
  // Predicated region
  $region10: #{forward.3} parent=0 // pred_check
    _
  $region11: #{forward.3} parent=0 // pred_check_branch
    %119 = sbr.rel (0) target = $region13
  $region12: #{forward.3} parent=0 // pred_region
    _
  $region13: #{forward.3} parent=0 // pred_fallthru
    _
  // Predicated region
  $region14: #{forward.3} parent=0 // pred_check
    _
  $region15: #{forward.3} parent=0 // pred_check_branch
    %121 = sbr.rel (0) target = $region17
  $region16: #{forward.3} parent=0 // pred_region
    _
  $region17: #{forward.3} parent=0 // pred_fallthru
    _

// kernel: forward.2
$region0: #{forward.2}
  #allocation0 [shape = 'u32[]', space=smem, size = 0x4, offset = 0x4, fixed_abs, tag = 'smem constant byte address 0x4 - core index']
  #allocation1 [shape = 'u32[72,128]{1,0:T(1,128)}', space=vmem, size = 0x9000, scoped, tag = 'internal scratch']
  %s0 = inlined_call_operand.vmem [shape: f32[40,128], index: 0, kind: input, shape index: {}]
  %s1 = inlined_call_operand.vmem [shape: f32[128,64], index: 1, kind: input, shape index: {}]
  %s2 = inlined_call_operand.vmem [shape: f32[1,64], index: 2, kind: input, shape index: {}]
  %s3 = inlined_call_operand.vmem [shape: f32[40,64], index: 3, kind: input, shape index: {}]
  %s4 = inlined_call_operand.vmem [shape: bf16[40,40], index: 4, kind: input, shape index: {}]
  %s5 = inlined_call_operand.hbm [shape: f32[2,192,256], index: 5, kind: input, shape index: {}]
  %s6 = inlined_call_operand.vmem [shape: f32[2,1,256], index: 6, kind: input, shape index: {}]
  %s7 = inlined_call_operand.vmem [shape: f32[2,256,4], index: 7, kind: input, shape index: {}]
  %s8 = inlined_call_operand.vmem [shape: f32[2,1,4], index: 8, kind: input, shape index: {}]
  %s9 = inlined_call_operand.vmem [shape: f32[40,256], index: 9, kind: output, shape index: {}]
  %s10 = sld [smem:[#allocation0]]
  $region50: #{forward.2} parent=0
    _
  %s12 = ssub.s32 1, %s10
  %s13 = scalar_select 0, %s12, %s10
  $region1: #{forward.2} parent=0
    #allocation2 [shape = 'u8[393216]{0}', space=vmem, size = 0x60000, scoped, tag = 'input window, operand 5, single buffered']
    #allocation3 [shape = 's32[1]{0}', space=sflag, size = 0x4, scoped, tag = 'scoped memory for forward.2']
    %14 = vsyncpa [#allocation3], 0
    // Predicated region
    $region2: #{forward.2} parent=1 // pred_check
      _
    $region3: #{forward.2} parent=1 // pred_check_branch
      %16 = sbr.rel (0) target = $region5
    $region4: #{forward.2} parent=1 // pred_region
      _
    $region5: #{forward.2} parent=1 // pred_fallthru
      _
    // Predicated region
    $region6: #{forward.2} parent=1 // pred_check
      _
    $region7: #{forward.2} parent=1 // pred_check_branch
      %18 = sbr.rel (0) target = $region9
    $region8: #{forward.2} parent=1 // pred_region
      _
    $region9: #{forward.2} parent=1 // pred_fallthru
      _
    // Predicated region
    $region10: #{forward.2} parent=1 // pred_check
      _
    $region11: #{forward.2} parent=1 // pred_check_branch
      %20 = sbr.rel (0) target = $region13
    $region12: #{forward.2} parent=1 // pred_region
      _
    $region13: #{forward.2} parent=1 // pred_fallthru
      _
    // Predicated region
    $region14: #{forward.2} parent=1 // pred_check
      _
    $region15: #{forward.2} parent=1 // pred_check_branch
      %22 = sbr.rel (0) target = $region17
    $region16: #{forward.2} parent=1 // pred_region
      _
    $region17: #{forward.2} parent=1 // pred_fallthru
      _
    // Predicated region
    $region18: #{forward.2} parent=1 // pred_check
      _
    $region19: #{forward.2} parent=1 // pred_check_branch
      %24 = sbr.rel (0) target = $region21
    $region20: #{forward.2} parent=1 // pred_region
      _
    $region21: #{forward.2} parent=1 // pred_fallthru
      _
    // Predicated region
    $region22: #{forward.2} parent=1 // pred_check
      _
    $region23: #{forward.2} parent=1 // pred_check_branch
      %26 = sbr.rel (0) target = $region25
    $region24: #{forward.2} parent=1 // pred_region
      %28 = vsyncadd [#allocation3], 0
      %s29 = sshll.u32 %s5, 4
      %s30 = int_to_ptr.hbm [resolvable:$true] %s29
      %s31 = sshll.u32 [#allocation2], 4
      %s32 = int_to_ptr.vmem [resolvable:$true] %s31
      %37 = dma.hbm_to_vmem [thread:$0]  %s30, 12288, %s32, [#allocation3], 256, 256, 16
    $region25: #{forward.2} parent=1 // pred_fallthru
      _
    // Predicated region
    $region26: #{forward.2} parent=1 // pred_check
      _
    $region27: #{forward.2} parent=1 // pred_check_branch
      %39 = sbr.rel (0) target = $region29
    $region28: #{forward.2} parent=1 // pred_region
      _
    $region29: #{forward.2} parent=1 // pred_fallthru
      _
    // Predicated region
    $region30: #{forward.2} parent=1 // pred_check
      _
    $region31: #{forward.2} parent=1 // pred_check_branch
      %41 = sbr.rel (0) target = $region33
    $region32: #{forward.2} parent=1 // pred_region
      _
    $region33: #{forward.2} parent=1 // pred_fallthru
      _
    // Predicated region
    $region34: #{forward.2} parent=1 // pred_check
      _
    $region35: #{forward.2} parent=1 // pred_check_branch
      %43 = sbr.rel (0) target = $region37
    $region36: #{forward.2} parent=1 // pred_region
      _
    $region37: #{forward.2} parent=1 // pred_fallthru
      _
    // Predicated region
    $region38: #{forward.2} parent=1 // pred_check
      _
    $region39: #{forward.2} parent=1 // pred_check_branch
      %45 = sbr.rel (0) target = $region41
    $region40: #{forward.2} parent=1 // pred_region
      %47 = dma.done [#allocation3], 12288
    $region41: #{forward.2} parent=1 // pred_fallthru
      _
    %v49 = vlaneseq
    %v50 = vshrl.u32 %v49, 7
    %v51 = vadd.s32 %v50, 8
    %v52 = vadd.s32 %v50, 16
    %v53 = vadd.s32 %v50, 24
    %v54 = vadd.s32 %v50, 32
    %vm55 = vcmp.lt.s32.totalorder %v50, 16
    %vm56 = vcmp.lt.s32.totalorder %v51, 16
    %vm57 = vcmp.lt.s32.totalorder %v52, 16
    %vm58 = vcmp.lt.s32.totalorder %v53, 16
    %vm59 = vcmp.lt.s32.totalorder %v54, 16
    %v60 = vsel %vm55, 1, 0
    %v61 = vsel %vm56, 1, 0
    %v62 = vsel %vm57, 1, 0
    %v63 = vsel %vm58, 1, 0
    %v64 = vsel %vm59, 1, 0
    %v65 = vcvt.s32.f32 %v60
    %v66 = vcvt.s32.f32 %v61
    %v67 = vcvt.s32.f32 %v62
    %v68 = vcvt.s32.f32 %v63
    %v69 = vcvt.s32.f32 %v64
    %v70 = vsub.f32 1.0, %v65
    %v71 = vsub.f32 1.0, %v66
    %v72 = vsub.f32 1.0, %v67
    %v73 = vsub.f32 1.0, %v68
    %v74 = vsub.f32 1.0, %v69
    %v75 = vld [vmem:[%s0] sm:$0xff]
    %v76 = vld [vmem:[%s0 + $0x8] sm:$0xff]
    %v77 = vld [vmem:[%s0 + $0x10] sm:$0xff]
    %v78 = vld [vmem:[%s0 + $0x18] sm:$0xff]
    %v79 = vld [vmem:[%s0 + $0x20] sm:$0xff]
    %v80 = vmul.f32 %v75, %v65
    %v81 = vmul.f32 %v76, %v66
    %v82 = vmul.f32 %v77, %v67
    %v83 = vmul.f32 %v78, %v68
    %v84 = vmul.f32 %v79, %v69
    %v85 = vadd.f32 %v80, %v81
    %v86 = vadd.f32 %v85, %v82
    %v87 = vadd.f32 %v86, %v83
    %v88 = vadd.f32 %v87, %v84
    %89 = vadd.xlane.f32.xlu0 %v88
    %v90 = vpop.xlane.xlu0 %89
    %v91 = vrot.slane %v90, 4
    %v92 = vadd.f32 %v90, %v91
    %v93 = vrot.slane %v92, 2
    %v94 = vadd.f32 %v92, %v93
    %v95 = vrot.slane %v94, 1
    %v96 = vadd.f32 %v94, %v95
    %s97 = vtos %v96
    %v98 = vrcp.pop 2048.0
    %v99 = vmul.f32 2048.0, %v98
    %v100 = vsub.f32 1.0, %v99
    %v101 = vmul.f32 %v98, %v100
    %v102 = vadd.f32 %v98, %v101
    %vm103 = vweird.f32 %v98
    %v104 = vsel %vm103, %v98, %v102
    %s105 = vtos %v104
    %s106 = smul.f32 %s97, %s105
    %v107 = vstv %s106
    %v108 = vsub.f32 %v75, %v107
    %v109 = vsub.f32 %v76, %v107
    %v110 = vsub.f32 %v77, %v107
    %v111 = vsub.f32 %v78, %v107
    %v112 = vsub.f32 %v79, %v107
    %v113 = vmul.f32 %v108, %v65
    %v114 = vmul.f32 %v109, %v66
    %v115 = vmul.f32 %v110, %v67
    %v116 = vmul.f32 %v111, %v68
    %v117 = vmul.f32 %v112, %v69
    %v118 = vmul.f32 %v113, %v113
    %v119 = vmul.f32 %v114, %v114
    %v120 = vmul.f32 %v115, %v115
    %v121 = vmul.f32 %v116, %v116
    %v122 = vmul.f32 %v117, %v117
    %v123 = vadd.f32 %v118, %v119
    %v124 = vadd.f32 %v123, %v120
    %v125 = vadd.f32 %v124, %v121
    %v126 = vadd.f32 %v125, %v122
    %127 = vadd.xlane.f32.xlu0 %v126
    %v128 = vpop.xlane.xlu0 %127
    %v129 = vrot.slane %v128, 4
    %v130 = vadd.f32 %v128, %v129
    %v131 = vrot.slane %v130, 2
    %v132 = vadd.f32 %v130, %v131
    %v133 = vrot.slane %v132, 1
    %v134 = vadd.f32 %v132, %v133
    %s135 = vtos %v134
    %v136 = vrcp.pop 2047.0
    %v137 = vmul.f32 2047.0, %v136
    %v138 = vsub.f32 1.0, %v137
    %v139 = vmul.f32 %v136, %v138
    %v140 = vadd.f32 %v136, %v139
    %vm141 = vweird.f32 %v136
    %v142 = vsel %vm141, %v136, %v140
    %s143 = vtos %v142
    %s144 = smul.f32 %s135, %s143
    %v145 = vstv %s144
    %v146 = vrsqrt.pop %v145
    %v147 = vmul.f32 %v146, %v145
    %v148 = vmul.f32 %v147, %v146
    %v149 = vmul.f32 0.5, %v148
    %v150 = vsub.f32 1.5, %v149
    %v151 = vmul.f32 %v146, %v150
    %v152 = vmul.f32 %v145, %v151
    %vm153 = vcmp.eq.f32.partialorder %v145, inf
    %v154 = vsel %vm153, %v145, %v152
    %vm155 = vcmp.eq.f32.partialorder %v145, 0.0
    %v156 = vand.u32 %v145, 2147483648
    %v157 = vsel %vm155, %v156, %v154
    %s158 = vtos %v157
    %v159 = vmul.f32 %v75, %v70
    %v160 = vmul.f32 %v76, %v71
    %v161 = vmul.f32 %v77, %v72
    %v162 = vmul.f32 %v78, %v73
    %v163 = vmul.f32 %v79, %v74
    %v164 = vadd.f32 %v159, %v160
    %v165 = vadd.f32 %v164, %v161
    %v166 = vadd.f32 %v165, %v162
    %v167 = vadd.f32 %v166, %v163
    %168 = vadd.xlane.f32.xlu0 %v167
    %v169 = vpop.xlane.xlu0 %168
    %v170 = vrot.slane %v169, 4
    %v171 = vadd.f32 %v169, %v170
    %v172 = vrot.slane %v171, 2
    %v173 = vadd.f32 %v171, %v172
    %v174 = vrot.slane %v173, 1
    %v175 = vadd.f32 %v173, %v174
    %s176 = vtos %v175
    %v177 = vrcp.pop 3072.0
    %v178 = vmul.f32 3072.0, %v177
    %v179 = vsub.f32 1.0, %v178
    %v180 = vmul.f32 %v177, %v179
    %v181 = vadd.f32 %v177, %v180
    %vm182 = vweird.f32 %v177
    %v183 = vsel %vm182, %v177, %v181
    %s184 = vtos %v183
    %s185 = smul.f32 %s176, %s184
    %v186 = vstv %s185
    %v187 = vsub.f32 %v75, %v186
    %v188 = vsub.f32 %v76, %v186
    %v189 = vsub.f32 %v77, %v186
    %v190 = vsub.f32 %v78, %v186
    %v191 = vsub.f32 %v79, %v186
    %v192 = vmul.f32 %v187, %v70
    %v193 = vmul.f32 %v188, %v71
    %v194 = vmul.f32 %v189, %v72
    %v195 = vmul.f32 %v190, %v73
    %v196 = vmul.f32 %v191, %v74
    %v197 = vmul.f32 %v192, %v192
    %v198 = vmul.f32 %v193, %v193
    %v199 = vmul.f32 %v194, %v194
    %v200 = vmul.f32 %v195, %v195
    %v201 = vmul.f32 %v196, %v196
    %v202 = vadd.f32 %v197, %v198
    %v203 = vadd.f32 %v202, %v199
    %v204 = vadd.f32 %v203, %v200
    %v205 = vadd.f32 %v204, %v201
    %206 = vadd.xlane.f32.xlu0 %v205
    %v207 = vpop.xlane.xlu0 %206
    %v208 = vrot.slane %v207, 4
    %v209 = vadd.f32 %v207, %v208
    %v210 = vrot.slane %v209, 2
    %v211 = vadd.f32 %v209, %v210
    %v212 = vrot.slane %v211, 1
    %v213 = vadd.f32 %v211, %v212
    %s214 = vtos %v213
    %v215 = vrcp.pop 3071.0
    %v216 = vmul.f32 3071.0, %v215
    %v217 = vsub.f32 1.0, %v216
    %v218 = vmul.f32 %v215, %v217
    %v219 = vadd.f32 %v215, %v218
    %vm220 = vweird.f32 %v215
    %v221 = vsel %vm220, %v215, %v219
    %s222 = vtos %v221
    %s223 = smul.f32 %s214, %s222
    %v224 = vstv %s223
    %v225 = vrsqrt.pop %v224
    %v226 = vmul.f32 %v225, %v224
    %v227 = vmul.f32 %v226, %v225
    %v228 = vmul.f32 0.5, %v227
    %v229 = vsub.f32 1.5, %v228
    %v230 = vmul.f32 %v225, %v229
    %v231 = vmul.f32 %v224, %v230
    %vm232 = vcmp.eq.f32.partialorder %v224, inf
    %v233 = vsel %vm232, %v224, %v231
    %vm234 = vcmp.eq.f32.partialorder %v224, 0.0
    %v235 = vand.u32 %v224, 2147483648
    %v236 = vsel %vm234, %v235, %v233
    %s237 = vtos %v236
    %v238 = vmul.f32 %v65, %v107
    %v239 = vmul.f32 %v66, %v107
    %v240 = vmul.f32 %v67, %v107
    %v241 = vmul.f32 %v68, %v107
    %v242 = vmul.f32 %v69, %v107
    %v243 = vmul.f32 %v70, %v186
    %v244 = vmul.f32 %v71, %v186
    %v245 = vmul.f32 %v72, %v186
    %v246 = vmul.f32 %v73, %v186
    %v247 = vmul.f32 %v74, %v186
    %v248 = vadd.f32 %v238, %v243
    %v249 = vadd.f32 %v239, %v244
    %v250 = vadd.f32 %v240, %v245
    %v251 = vadd.f32 %v241, %v246
    %v252 = vadd.f32 %v242, %v247
    %v253 = vstv %s158
    %v254 = vmul.f32 %v65, %v253
    %v255 = vmul.f32 %v66, %v253
    %v256 = vmul.f32 %v67, %v253
    %v257 = vmul.f32 %v68, %v253
    %v258 = vmul.f32 %v69, %v253
    %v259 = vstv %s237
    %v260 = vmul.f32 %v70, %v259
    %v261 = vmul.f32 %v71, %v259
    %v262 = vmul.f32 %v72, %v259
    %v263 = vmul.f32 %v73, %v259
    %v264 = vmul.f32 %v74, %v259
    %v265 = vadd.f32 %v254, %v260
    %v266 = vadd.f32 %v255, %v261
    %v267 = vadd.f32 %v256, %v262
    %v268 = vadd.f32 %v257, %v263
    %v269 = vadd.f32 %v258, %v264
    %v270 = vsub.f32 %v75, %v248
    %v271 = vsub.f32 %v76, %v249
    %v272 = vsub.f32 %v77, %v250
    %v273 = vsub.f32 %v78, %v251
    %v274 = vsub.f32 %v79, %v252
    %v275 = vmul.f32 %v270, 0.1
    %v276 = vmul.f32 %v271, 0.1
    %v277 = vmul.f32 %v272, 0.1
    %v278 = vmul.f32 %v273, 0.1
    %v279 = vmul.f32 %v274, 0.1
    %v280 = vrcp.pop %v265
    %v281 = vmul.f32 %v265, %v280
    %v282 = vsub.f32 1.0, %v281
    %v283 = vmul.f32 %v280, %v282
    %v284 = vadd.f32 %v280, %v283
    %vm285 = vweird.f32 %v265
    %vm286 = vweird.f32 %v280
    %vm287 = vmor %vm285, %vm286
    %v288 = vsel %vm287, %v280, %v284
    %v289 = vand.u32 2147483647, %v265
    %vm290 = vcmp.eq.f32.partialorder %v289, 8.507059e+37
    %v291 = vand.u32 %v265, 2147483648
    %v292 = vor.u32 1.1754944e-38, %v291
    %v293 = vsel %vm290, %v292, %v288
    %v294 = vmul.f32 %v275, %v293
    %v295 = vrcp.pop %v266
    %v296 = vmul.f32 %v266, %v295
    %v297 = vsub.f32 1.0, %v296
    %v298 = vmul.f32 %v295, %v297
    %v299 = vadd.f32 %v295, %v298
    %vm300 = vweird.f32 %v266
    %vm301 = vweird.f32 %v295
    %vm302 = vmor %vm300, %vm301
    %v303 = vsel %vm302, %v295, %v299
    %v304 = vand.u32 2147483647, %v266
    %vm305 = vcmp.eq.f32.partialorder %v304, 8.507059e+37
    %v306 = vand.u32 %v266, 2147483648
    %v307 = vor.u32 1.1754944e-38, %v306
    %v308 = vsel %vm305, %v307, %v303
    %v309 = vmul.f32 %v276, %v308
    %v310 = vrcp.pop %v267
    %v311 = vmul.f32 %v267, %v310
    %v312 = vsub.f32 1.0, %v311
    %v313 = vmul.f32 %v310, %v312
    %v314 = vadd.f32 %v310, %v313
    %vm315 = vweird.f32 %v267
    %vm316 = vweird.f32 %v310
    %vm317 = vmor %vm315, %vm316
    %v318 = vsel %vm317, %v310, %v314
    %v319 = vand.u32 2147483647, %v267
    %vm320 = vcmp.eq.f32.partialorder %v319, 8.507059e+37
    %v321 = vand.u32 %v267, 2147483648
    %v322 = vor.u32 1.1754944e-38, %v321
    %v323 = vsel %vm320, %v322, %v318
    %v324 = vmul.f32 %v277, %v323
    %v325 = vrcp.pop %v268
    %v326 = vmul.f32 %v268, %v325
    %v327 = vsub.f32 1.0, %v326
    %v328 = vmul.f32 %v325, %v327
    %v329 = vadd.f32 %v325, %v328
    %vm330 = vweird.f32 %v268
    %vm331 = vweird.f32 %v325
    %vm332 = vmor %vm330, %vm331
    %v333 = vsel %vm332, %v325, %v329
    %v334 = vand.u32 2147483647, %v268
    %vm335 = vcmp.eq.f32.partialorder %v334, 8.507059e+37
    %v336 = vand.u32 %v268, 2147483648
    %v337 = vor.u32 1.1754944e-38, %v336
    %v338 = vsel %vm335, %v337, %v333
    %v339 = vmul.f32 %v278, %v338
    %v340 = vrcp.pop %v269
    %v341 = vmul.f32 %v269, %v340
    %v342 = vsub.f32 1.0, %v341
    %v343 = vmul.f32 %v340, %v342
    %v344 = vadd.f32 %v340, %v343
    %vm345 = vweird.f32 %v269
    %vm346 = vweird.f32 %v340
    %vm347 = vmor %vm345, %vm346
    %v348 = vsel %vm347, %v340, %v344
    %v349 = vand.u32 2147483647, %v269
    %vm350 = vcmp.eq.f32.partialorder %v349, 8.507059e+37
    %v351 = vand.u32 %v269, 2147483648
    %v352 = vor.u32 1.1754944e-38, %v351
    %v353 = vsel %vm350, %v352, %v348
    %v354 = vmul.f32 %v279, %v353
    %v355 = vpack.c.bf16 %v309, %v294
    %v356 = vpack.c.bf16 %v339, %v324
    %v357 = vpack.c.bf16 %v354, %v354
    %v358 = vld [vmem:[%s1] sm:$0xff]
    %v359 = vld [vmem:[%s1 + $0x8] sm:$0xff]
    %v360 = vld [vmem:[%s1 + $0x10] sm:$0xff]
    %v361 = vld [vmem:[%s1 + $0x18] sm:$0xff]
    %v362 = vld [vmem:[%s1 + $0x20] sm:$0xff]
    %v363 = vld [vmem:[%s1 + $0x28] sm:$0xff]
    %v364 = vld [vmem:[%s1 + $0x30] sm:$0xff]
    %v365 = vld [vmem:[%s1 + $0x38] sm:$0xff]
    %v366 = vld [vmem:[%s1 + $0x40] sm:$0xff]
    %v367 = vld [vmem:[%s1 + $0x48] sm:$0xff]
    %v368 = vld [vmem:[%s1 + $0x50] sm:$0xff]
    %v369 = vld [vmem:[%s1 + $0x58] sm:$0xff]
    %v370 = vld [vmem:[%s1 + $0x60] sm:$0xff]
    %v371 = vld [vmem:[%s1 + $0x68] sm:$0xff]
    %v372 = vld [vmem:[%s1 + $0x70] sm:$0xff]
    %v373 = vld [vmem:[%s1 + $0x78] sm:$0xff]
    %v374 = vpack.c.bf16 %v359, %v358
    %v375 = vpack.c.bf16 %v361, %v360
    %v376 = vpack.c.bf16 %v363, %v362
    %v377 = vpack.c.bf16 %v365, %v364
    %v378 = vpack.c.bf16 %v367, %v366
    %v379 = vpack.c.bf16 %v369, %v368
    %v380 = vpack.c.bf16 %v371, %v370
    %v381 = vpack.c.bf16 %v373, %v372
    %v382 = vld [vmem:[%s2] sm:$0x1]
    %v384 = vperm.slane %v382, 0
    %386 = vmatpush.bf16.msra.mxu0 %v381
    %387 = vmatpush.bf16.msra.mxu0 %v380
    %388 = vmatpush.bf16.msra.mxu0 %v379
    %389 = vmatpush.bf16.msra.mxu0 %v378
    %390 = vmatpush.bf16.msra.mxu0 %v377
    %391 = vmatpush.bf16.msra.mxu0 %v376
    %392 = vmatpush.bf16.msra.mxu0 %v375
    %393 = vmatpush.bf16.msra.mxu0 %v374
    %394 = vmatmul.bf16.gmra.mxu0 %v355
    %v395 = vpop.f32.mrf.mxu0
    %v396 = vadd.f32 %v384, %v395
    %v397 = vpop.f32.mrf.mxu0
    %v398 = vadd.f32 %v384, %v397
    %399 = vmatmul.bf16.gmra.mxu0 %v356
    %v400 = vpop.f32.mrf.mxu0
    %v401 = vadd.f32 %v384, %v400
    %v402 = vpop.f32.mrf.mxu0
    %v403 = vadd.f32 %v384, %v402
    %404 = vmatmul.bf16.gmra.mxu0 %v357
    %v405 = vpop.f32.mrf.mxu0
    %v406 = vadd.f32 %v384, %v405
    %v407 = vpop.f32.mrf.mxu0
    %408 = vdwg.mxu0
    %v409 = vmul.f32 %v396, %v65
    %v410 = vmul.f32 %v398, %v66
    %v411 = vmul.f32 %v401, %v67
    %v412 = vmul.f32 %v403, %v68
    %v413 = vmul.f32 %v406, %v69
    %vm414 = vcmask 523264
    %v415 = vsel %vm414, %v409, 0.0
    %v416 = vsel %vm414, %v410, 0.0
    %v417 = vadd.f32 %v415, %v416
    %v418 = vsel %vm414, %v411, 0.0
    %v419 = vadd.f32 %v417, %v418
    %v420 = vsel %vm414, %v412, 0.0
    %v421 = vadd.f32 %v419, %v420
    %v422 = vsel %vm414, %v413, 0.0
    %v423 = vadd.f32 %v421, %v422
    %424 = vadd.xlane.f32.xlu0 %v423
    %v425 = vpop.xlane.xlu0 %424
    %v426 = vrot.slane %v425, 4
    %v427 = vadd.f32 %v425, %v426
    %v428 = vrot.slane %v427, 2
    %v429 = vadd.f32 %v427, %v428
    %v430 = vrot.slane %v429, 1
    %v431 = vadd.f32 %v429, %v430
    %s432 = vtos %v431
    %v433 = vrcp.pop 1024.0
    %v434 = vmul.f32 1024.0, %v433
    %v435 = vsub.f32 1.0, %v434
    %v436 = vmul.f32 %v433, %v435
    %v437 = vadd.f32 %v433, %v436
    %vm438 = vweird.f32 %v433
    %v439 = vsel %vm438, %v433, %v437
    %s440 = vtos %v439
    %s441 = smul.f32 %s432, %s440
    %v442 = vstv %s441
    %v443 = vsub.f32 %v396, %v442
    %v444 = vsub.f32 %v398, %v442
    %v445 = vsub.f32 %v401, %v442
    %v446 = vsub.f32 %v403, %v442
    %v447 = vsub.f32 %v406, %v442
    %v448 = vmul.f32 %v443, %v65
    %v449 = vmul.f32 %v444, %v66
    %v450 = vmul.f32 %v445, %v67
    %v451 = vmul.f32 %v446, %v68
    %v452 = vmul.f32 %v447, %v69
    %v453 = vmul.f32 %v448, %v448
    %v454 = vmul.f32 %v449, %v449
    %v455 = vmul.f32 %v450, %v450
    %v456 = vmul.f32 %v451, %v451
    %v457 = vmul.f32 %v452, %v452
    %v458 = vsel %vm414, %v453, 0.0
    %v459 = vsel %vm414, %v454, 0.0
    %v460 = vadd.f32 %v458, %v459
    %v461 = vsel %vm414, %v455, 0.0
    %v462 = vadd.f32 %v460, %v461
    %v463 = vsel %vm414, %v456, 0.0
    %v464 = vadd.f32 %v462, %v463
    %v465 = vsel %vm414, %v457, 0.0
    %v466 = vadd.f32 %v464, %v465
    %467 = vadd.xlane.f32.xlu0 %v466
    %v468 = vpop.xlane.xlu0 %467
    %v469 = vrot.slane %v468, 4
    %v470 = vadd.f32 %v468, %v469
    %v471 = vrot.slane %v470, 2
    %v472 = vadd.f32 %v470, %v471
    %v473 = vrot.slane %v472, 1
    %v474 = vadd.f32 %v472, %v473
    %s475 = vtos %v474
    %v476 = vrcp.pop 1023.0
    %v477 = vmul.f32 1023.0, %v476
    %v478 = vsub.f32 1.0, %v477
    %v479 = vmul.f32 %v476, %v478
    %v480 = vadd.f32 %v476, %v479
    %vm481 = vweird.f32 %v476
    %v482 = vsel %vm481, %v476, %v480
    %s483 = vtos %v482
    %s484 = smul.f32 %s475, %s483
    %v485 = vstv %s484
    %v486 = vrsqrt.pop %v485
    %v487 = vmul.f32 %v486, %v485
    %v488 = vmul.f32 %v487, %v486
    %v489 = vmul.f32 0.5, %v488
    %v490 = vsub.f32 1.5, %v489
    %v491 = vmul.f32 %v486, %v490
    %v492 = vmul.f32 %v485, %v491
    %vm493 = vcmp.eq.f32.partialorder %v485, inf
    %v494 = vsel %vm493, %v485, %v492
    %vm495 = vcmp.eq.f32.partialorder %v485, 0.0
    %v496 = vand.u32 %v485, 2147483648
    %v497 = vsel %vm495, %v496, %v494
    %s498 = vtos %v497
    %v499 = vmul.f32 %v396, %v70
    %v500 = vmul.f32 %v398, %v71
    %v501 = vmul.f32 %v401, %v72
    %v502 = vmul.f32 %v403, %v73
    %v503 = vmul.f32 %v406, %v74
    %v504 = vsel %vm414, %v499, 0.0
    %v505 = vsel %vm414, %v500, 0.0
    %v506 = vadd.f32 %v504, %v505
    %v507 = vsel %vm414, %v501, 0.0
    %v508 = vadd.f32 %v506, %v507
    %v509 = vsel %vm414, %v502, 0.0
    %v510 = vadd.f32 %v508, %v509
    %v511 = vsel %vm414, %v503, 0.0
    %v512 = vadd.f32 %v510, %v511
    %513 = vadd.xlane.f32.xlu0 %v512
    %v514 = vpop.xlane.xlu0 %513
    %v515 = vrot.slane %v514, 4
    %v516 = vadd.f32 %v514, %v515
    %v517 = vrot.slane %v516, 2
    %v518 = vadd.f32 %v516, %v517
    %v519 = vrot.slane %v518, 1
    %v520 = vadd.f32 %v518, %v519
    %s521 = vtos %v520
    %v522 = vrcp.pop 1536.0
    %v523 = vmul.f32 1536.0, %v522
    %v524 = vsub.f32 1.0, %v523
    %v525 = vmul.f32 %v522, %v524
    %v526 = vadd.f32 %v522, %v525
    %vm527 = vweird.f32 %v522
    %v528 = vsel %vm527, %v522, %v526
    %s529 = vtos %v528
    %s530 = smul.f32 %s521, %s529
    %v531 = vstv %s530
    %v532 = vsub.f32 %v396, %v531
    %v533 = vsub.f32 %v398, %v531
    %v534 = vsub.f32 %v401, %v531
    %v535 = vsub.f32 %v403, %v531
    %v536 = vsub.f32 %v406, %v531
    %v537 = vmul.f32 %v532, %v70
    %v538 = vmul.f32 %v533, %v71
    %v539 = vmul.f32 %v534, %v72
    %v540 = vmul.f32 %v535, %v73
    %v541 = vmul.f32 %v536, %v74
    %v542 = vmul.f32 %v537, %v537
    %v543 = vmul.f32 %v538, %v538
    %v544 = vmul.f32 %v539, %v539
    %v545 = vmul.f32 %v540, %v540
    %v546 = vmul.f32 %v541, %v541
    %v547 = vsel %vm414, %v542, 0.0
    %v548 = vsel %vm414, %v543, 0.0
    %v549 = vadd.f32 %v547, %v548
    %v550 = vsel %vm414, %v544, 0.0
    %v551 = vadd.f32 %v549, %v550
    %v552 = vsel %vm414, %v545, 0.0
    %v553 = vadd.f32 %v551, %v552
    %v554 = vsel %vm414, %v546, 0.0
    %v555 = vadd.f32 %v553, %v554
    %556 = vadd.xlane.f32.xlu0 %v555
    %v557 = vpop.xlane.xlu0 %556
    %v558 = vrot.slane %v557, 4
    %v559 = vadd.f32 %v557, %v558
    %v560 = vrot.slane %v559, 2
    %v561 = vadd.f32 %v559, %v560
    %v562 = vrot.slane %v561, 1
    %v563 = vadd.f32 %v561, %v562
    %s564 = vtos %v563
    %v565 = vrcp.pop 1535.0
    %v566 = vmul.f32 1535.0, %v565
    %v567 = vsub.f32 1.0, %v566
    %v568 = vmul.f32 %v565, %v567
    %v569 = vadd.f32 %v565, %v568
    %vm570 = vweird.f32 %v565
    %v571 = vsel %vm570, %v565, %v569
    %s572 = vtos %v571
    %s573 = smul.f32 %s564, %s572
    %v574 = vstv %s573
    %v575 = vrsqrt.pop %v574
    %v576 = vmul.f32 %v575, %v574
    %v577 = vmul.f32 %v576, %v575
    %v578 = vmul.f32 0.5, %v577
    %v579 = vsub.f32 1.5, %v578
    %v580 = vmul.f32 %v575, %v579
    %v581 = vmul.f32 %v574, %v580
    %vm582 = vcmp.eq.f32.partialorder %v574, inf
    %v583 = vsel %vm582, %v574, %v581
    %vm584 = vcmp.eq.f32.partialorder %v574, 0.0
    %v585 = vand.u32 %v574, 2147483648
    %v586 = vsel %vm584, %v585, %v583
    %s587 = vtos %v586
    %v588 = vmul.f32 %v65, %v442
    %v589 = vmul.f32 %v66, %v442
    %v590 = vmul.f32 %v67, %v442
    %v591 = vmul.f32 %v68, %v442
    %v592 = vmul.f32 %v69, %v442
    %v593 = vmul.f32 %v70, %v531
    %v594 = vmul.f32 %v71, %v531
    %v595 = vmul.f32 %v72, %v531
    %v596 = vmul.f32 %v73, %v531
    %v597 = vmul.f32 %v74, %v531
    %v598 = vadd.f32 %v588, %v593
    %v599 = vadd.f32 %v589, %v594
    %v600 = vadd.f32 %v590, %v595
    %v601 = vadd.f32 %v591, %v596
    %v602 = vadd.f32 %v592, %v597
    %v603 = vstv %s498
    %v604 = vmul.f32 %v65, %v603
    %v605 = vmul.f32 %v66, %v603
    %v606 = vmul.f32 %v67, %v603
    %v607 = vmul.f32 %v68, %v603
    %v608 = vmul.f32 %v69, %v603
    %v609 = vstv %s587
    %v610 = vmul.f32 %v70, %v609
    %v611 = vmul.f32 %v71, %v609
    %v612 = vmul.f32 %v72, %v609
    %v613 = vmul.f32 %v73, %v609
    %v614 = vmul.f32 %v74, %v609
    %v615 = vadd.f32 %v604, %v610
    %v616 = vadd.f32 %v605, %v611
    %v617 = vadd.f32 %v606, %v612
    %v618 = vadd.f32 %v607, %v613
    %v619 = vadd.f32 %v608, %v614
    %v620 = vsub.f32 %v396, %v598
    %v621 = vsub.f32 %v398, %v599
    %v622 = vsub.f32 %v401, %v600
    %v623 = vsub.f32 %v403, %v601
    %v624 = vsub.f32 %v406, %v602
    %v625 = vmul.f32 %v620, 0.1
    %v626 = vmul.f32 %v621, 0.1
    %v627 = vmul.f32 %v622, 0.1
    %v628 = vmul.f32 %v623, 0.1
    %v629 = vmul.f32 %v624, 0.1
    %v630 = vrcp.pop %v615
    %v631 = vmul.f32 %v615, %v630
    %v632 = vsub.f32 1.0, %v631
    %v633 = vmul.f32 %v630, %v632
    %v634 = vadd.f32 %v630, %v633
    %vm635 = vweird.f32 %v615
    %vm636 = vweird.f32 %v630
    %vm637 = vmor %vm635, %vm636
    %v638 = vsel %vm637, %v630, %v634
    %v639 = vand.u32 2147483647, %v615
    %vm640 = vcmp.eq.f32.partialorder %v639, 8.507059e+37
    %v641 = vand.u32 %v615, 2147483648
    %v642 = vor.u32 1.1754944e-38, %v641
    %v643 = vsel %vm640, %v642, %v638
    %v644 = vmul.f32 %v625, %v643
    %v645 = vrcp.pop %v616
    %v646 = vmul.f32 %v616, %v645
    %v647 = vsub.f32 1.0, %v646
    %v648 = vmul.f32 %v645, %v647
    %v649 = vadd.f32 %v645, %v648
    %vm650 = vweird.f32 %v616
    %vm651 = vweird.f32 %v645
    %vm652 = vmor %vm650, %vm651
    %v653 = vsel %vm652, %v645, %v649
    %v654 = vand.u32 2147483647, %v616
    %vm655 = vcmp.eq.f32.partialorder %v654, 8.507059e+37
    %v656 = vand.u32 %v616, 2147483648
    %v657 = vor.u32 1.1754944e-38, %v656
    %v658 = vsel %vm655, %v657, %v653
    %v659 = vmul.f32 %v626, %v658
    %v660 = vrcp.pop %v617
    %v661 = vmul.f32 %v617, %v660
    %v662 = vsub.f32 1.0, %v661
    %v663 = vmul.f32 %v660, %v662
    %v664 = vadd.f32 %v660, %v663
    %vm665 = vweird.f32 %v617
    %vm666 = vweird.f32 %v660
    %vm667 = vmor %vm665, %vm666
    %v668 = vsel %vm667, %v660, %v664
    %v669 = vand.u32 2147483647, %v617
    %vm670 = vcmp.eq.f32.partialorder %v669, 8.507059e+37
    %v671 = vand.u32 %v617, 2147483648
    %v672 = vor.u32 1.1754944e-38, %v671
    %v673 = vsel %vm670, %v672, %v668
    %v674 = vmul.f32 %v627, %v673
    %v675 = vrcp.pop %v618
    %v676 = vmul.f32 %v618, %v675
    %v677 = vsub.f32 1.0, %v676
    %v678 = vmul.f32 %v675, %v677
    %v679 = vadd.f32 %v675, %v678
    %vm680 = vweird.f32 %v618
    %vm681 = vweird.f32 %v675
    %vm682 = vmor %vm680, %vm681
    %v683 = vsel %vm682, %v675, %v679
    %v684 = vand.u32 2147483647, %v618
    %vm685 = vcmp.eq.f32.partialorder %v684, 8.507059e+37
    %v686 = vand.u32 %v618, 2147483648
    %v687 = vor.u32 1.1754944e-38, %v686
    %v688 = vsel %vm685, %v687, %v683
    %v689 = vmul.f32 %v628, %v688
    %v690 = vrcp.pop %v619
    %v691 = vmul.f32 %v619, %v690
    %v692 = vsub.f32 1.0, %v691
    %v693 = vmul.f32 %v690, %v692
    %v694 = vadd.f32 %v690, %v693
    %vm695 = vweird.f32 %v619
    %vm696 = vweird.f32 %v690
    %vm697 = vmor %vm695, %vm696
    %v698 = vsel %vm697, %v690, %v694
    %v699 = vand.u32 2147483647, %v619
    %vm700 = vcmp.eq.f32.partialorder %v699, 8.507059e+37
    %v701 = vand.u32 %v619, 2147483648
    %v702 = vor.u32 1.1754944e-38, %v701
    %v703 = vsel %vm700, %v702, %v698
    %v704 = vmul.f32 %v629, %v703
    %v705 = vld [vmem:[%s3] sm:$0xff]
    %v706 = vld [vmem:[%s3 + $0x8] sm:$0xff]
    %v707 = vld [vmem:[%s3 + $0x10] sm:$0xff]
    %v708 = vld [vmem:[%s3 + $0x18] sm:$0xff]
    %v709 = vld [vmem:[%s3 + $0x20] sm:$0xff]
    %v710 = vadd.f32 %v705, %v644
    %v711 = vadd.f32 %v706, %v659
    %v712 = vadd.f32 %v707, %v674
    %v713 = vadd.f32 %v708, %v689
    %v714 = vadd.f32 %v709, %v704
    %v715 = vld [vmem:[%s4] sm:$0xf]
    %v716 = vld [vmem:[%s4 + $0x4] sm:$0xf]
    %v717 = vld [vmem:[%s4 + $0x8] sm:$0xf]
    %v718 = vld [vmem:[%s4 + $0xc] sm:$0xf]
    %v719 = vld [vmem:[%s4 + $0x10] sm:$0xf]
    %v720 = vpack.c.bf16 %v711, %v710
    %v721 = vpack.c.bf16 %v713, %v712
    %v722 = vpack.c.bf16 %v714, %v714
    %v728 = vunpack.c.l.b16 %v715
    %v729 = vunpack.c.l.b16 %v716
    %v730 = vunpack.c.l.b16 %v717
    %v731 = vunpack.c.l.b16 %v718
    %v732 = vunpack.c.l.b16 %v719
    %v733 = vpack.c.b16 %v729, %v728
    %v734 = vpack.c.b16 %v731, %v730
    %v735 = vpack.c.b16 %v732, %v732
    %vm736 = vcmask 326656
    %v738 = vsel %vm736, %v733, 0
    %v741 = vsel %vm736, %v734, 0
    %v744 = vsel %vm736, %v735, 0
    %vm746 = vcmask 1043456
    %v748 = vsel %vm746, %v722, 0
    %750 = vmatpush.bf16.msra.mxu0 0
    %751 = vmatpush.bf16.msra.mxu0 0
    %752 = vmatpush.bf16.msra.mxu0 0
    %753 = vmatpush.bf16.msra.mxu0 0
    %754 = vmatpush.bf16.msra.mxu0 0
    %755 = vmatpush.bf16.msra.mxu0 %v748
    %756 = vmatpush.bf16.msra.mxu0 %v721
    %757 = vmatpush.bf16.msra.mxu0 %v720
    %758 = vmatmul.bf16.gmra.mxu0 %v738
    %v759 = vpop.f32.mrf.mxu0
    %v760 = vadd.f32 0.0, %v759
    %v761 = vpop.f32.mrf.mxu0
    %v762 = vadd.f32 0.0, %v761
    %763 = vmatmul.bf16.gmra.mxu0 %v741
    %v764 = vpop.f32.mrf.mxu0
    %v765 = vadd.f32 0.0, %v764
    %v766 = vpop.f32.mrf.mxu0
    %v767 = vadd.f32 0.0, %v766
    %768 = vmatmul.bf16.gmra.mxu0 %v744
    %v769 = vpop.f32.mrf.mxu0
    %v770 = vadd.f32 0.0, %v769
    %v771 = vpop.f32.mrf.mxu0
    %772 = vdwg.mxu0
    %v773 = vadd.f32 %v710, %v760
    %v774 = vadd.f32 %v711, %v762
    %v775 = vadd.f32 %v712, %v765
    %v776 = vadd.f32 %v713, %v767
    %v777 = vadd.f32 %v714, %v770
    %v778 = vpack.c.bf16 %v762, %v760
    %v779 = vpack.c.bf16 %v767, %v765
    %v780 = vpack.c.bf16 %v770, %v770
    %v782 = vsel %vm746, %v780, 0
    %784 = vmatpush.bf16.msra.mxu0 0
    %785 = vmatpush.bf16.msra.mxu0 0
    %786 = vmatpush.bf16.msra.mxu0 0
    %787 = vmatpush.bf16.msra.mxu0 0
    %788 = vmatpush.bf16.msra.mxu0 0
    %789 = vmatpush.bf16.msra.mxu0 %v782
    %790 = vmatpush.bf16.msra.mxu0 %v779
    %791 = vmatpush.bf16.msra.mxu0 %v778
    %792 = vmatmul.bf16.gmra.mxu0 %v738
    %v793 = vpop.f32.mrf.mxu0
    %v794 = vadd.f32 0.0, %v793
    %v795 = vpop.f32.mrf.mxu0
    %v796 = vadd.f32 0.0, %v795
    %797 = vmatmul.bf16.gmra.mxu0 %v741
    %v798 = vpop.f32.mrf.mxu0
    %v799 = vadd.f32 0.0, %v798
    %v800 = vpop.f32.mrf.mxu0
    %v801 = vadd.f32 0.0, %v800
    %802 = vmatmul.bf16.gmra.mxu0 %v744
    %v803 = vpop.f32.mrf.mxu0
    %v804 = vadd.f32 0.0, %v803
    %v805 = vpop.f32.mrf.mxu0
    %806 = vdwg.mxu0
    %v807 = vadd.f32 %v773, %v794
    %v808 = vadd.f32 %v774, %v796
    %v809 = vadd.f32 %v775, %v799
    %v810 = vadd.f32 %v776, %v801
    %v811 = vadd.f32 %v777, %v804
    %v812 = vpack.c.bf16 %v796, %v794
    %v813 = vpack.c.bf16 %v801, %v799
    %v814 = vpack.c.bf16 %v804, %v804
    %v816 = vsel %vm746, %v814, 0
    %818 = vmatpush.bf16.msra.mxu0 0
    %819 = vmatpush.bf16.msra.mxu0 0
    %820 = vmatpush.bf16.msra.mxu0 0
    %821 = vmatpush.bf16.msra.mxu0 0
    %822 = vmatpush.bf16.msra.mxu0 0
    %823 = vmatpush.bf16.msra.mxu0 %v816
    %824 = vmatpush.bf16.msra.mxu0 %v813
    %825 = vmatpush.bf16.msra.mxu0 %v812
    %826 = vmatmul.bf16.gmra.mxu0 %v738
    %v827 = vpop.f32.mrf.mxu0
    %v828 = vadd.f32 0.0, %v827
    %v829 = vpop.f32.mrf.mxu0
    %v830 = vadd.f32 0.0, %v829
    %831 = vmatmul.bf16.gmra.mxu0 %v741
    %v832 = vpop.f32.mrf.mxu0
    %v833 = vadd.f32 0.0, %v832
    %v834 = vpop.f32.mrf.mxu0
    %v835 = vadd.f32 0.0, %v834
    %836 = vmatmul.bf16.gmra.mxu0 %v744
    %v837 = vpop.f32.mrf.mxu0
    %v838 = vadd.f32 0.0, %v837
    %v839 = vpop.f32.mrf.mxu0
    %840 = vdwg.mxu0
    %v841 = vadd.f32 %v807, %v828
    %v842 = vadd.f32 %v808, %v830
    %v843 = vadd.f32 %v809, %v833
    %v844 = vadd.f32 %v810, %v835
    %v845 = vadd.f32 %v811, %v838
    %v846 = vmul.f32 %v841, 0.25
    %v847 = vmul.f32 %v842, 0.25
    %v848 = vmul.f32 %v843, 0.25
    %v849 = vmul.f32 %v844, 0.25
    %v850 = vmul.f32 %v845, 0.25
    %856 = vrot.lane.b32.xlu0 %v846, 64
    %v857 = vpop.permute.xlu0 %856
    %858 = vrot.lane.b32.xlu0 %v847, 64
    %v859 = vpop.permute.xlu0 %858
    %860 = vrot.lane.b32.xlu0 %v848, 64
    %v861 = vpop.permute.xlu0 %860
    %862 = vrot.lane.b32.xlu0 %v849, 64
    %v863 = vpop.permute.xlu0 %862
    %864 = vrot.lane.b32.xlu0 %v850, 64
    %v865 = vpop.permute.xlu0 %864
    %v871 = vsel %vm414, %v710, %v857
    %v872 = vsel %vm414, %v711, %v859
    %v873 = vsel %vm414, %v712, %v861
    %v874 = vsel %vm414, %v713, %v863
    %v875 = vsel %vm414, %v714, %v865
    %v876 = vld [vmem:[#allocation2] sm:$0xff]
    %v877 = vld [vmem:[#allocation2 + $0x8] sm:$0xff]
    %v878 = vld [vmem:[#allocation2 + $0x10] sm:$0xff]
    %v879 = vld [vmem:[#allocation2 + $0x18] sm:$0xff]
    %v880 = vld [vmem:[#allocation2 + $0x20] sm:$0xff]
    %v881 = vld [vmem:[#allocation2 + $0x28] sm:$0xff]
    %v882 = vld [vmem:[#allocation2 + $0x30] sm:$0xff]
    %v883 = vld [vmem:[#allocation2 + $0x38] sm:$0xff]
    %v884 = vld [vmem:[#allocation2 + $0x40] sm:$0xff]
    %v885 = vld [vmem:[#allocation2 + $0x48] sm:$0xff]
    %v886 = vld [vmem:[#allocation2 + $0x50] sm:$0xff]
    %v887 = vld [vmem:[#allocation2 + $0x58] sm:$0xff]
    %v888 = vld [vmem:[#allocation2 + $0x60] sm:$0xff]
    %v889 = vld [vmem:[#allocation2 + $0x68] sm:$0xff]
    %v890 = vld [vmem:[#allocation2 + $0x70] sm:$0xff]
    %v891 = vld [vmem:[#allocation2 + $0x78] sm:$0xff]
    %v892 = vld [vmem:[#allocation2 + $0x80] sm:$0xff]
    %v893 = vld [vmem:[#allocation2 + $0x88] sm:$0xff]
    %v894 = vld [vmem:[#allocation2 + $0x90] sm:$0xff]
    %v895 = vld [vmem:[#allocation2 + $0x98] sm:$0xff]
    %v896 = vld [vmem:[#allocation2 + $0xa0] sm:$0xff]
    %v897 = vld [vmem:[#allocation2 + $0xa8] sm:$0xff]
    %v898 = vld [vmem:[#allocation2 + $0xb0] sm:$0xff]
    %v899 = vld [vmem:[#allocation2 + $0xb8] sm:$0xff]
    %v900 = vld [vmem:[#allocation2 + $0xc0] sm:$0xff]
    %v901 = vld [vmem:[#allocation2 + $0xc8] sm:$0xff]
    %v902 = vld [vmem:[#allocation2 + $0xd0] sm:$0xff]
    %v903 = vld [vmem:[#allocation2 + $0xd8] sm:$0xff]
    %v904 = vld [vmem:[#allocation2 + $0xe0] sm:$0xff]
    %v905 = vld [vmem:[#allocation2 + $0xe8] sm:$0xff]
    %v906 = vld [vmem:[#allocation2 + $0xf0] sm:$0xff]
    %v907 = vld [vmem:[#allocation2 + $0xf8] sm:$0xff]
    %v908 = vld [vmem:[#allocation2 + $0x100] sm:$0xff]
    %v909 = vld [vmem:[#allocation2 + $0x108] sm:$0xff]
    %v910 = vld [vmem:[#allocation2 + $0x110] sm:$0xff]
    %v911 = vld [vmem:[#allocation2 + $0x118] sm:$0xff]
    %v912 = vld [vmem:[#allocation2 + $0x120] sm:$0xff]
    %v913 = vld [vmem:[#allocation2 + $0x128] sm:$0xff]
    %v914 = vld [vmem:[#allocation2 + $0x130] sm:$0xff]
    %v915 = vld [vmem:[#allocation2 + $0x138] sm:$0xff]
    %v916 = vld [vmem:[#allocation2 + $0x140] sm:$0xff]
    %v917 = vld [vmem:[#allocation2 + $0x148] sm:$0xff]
    %v918 = vld [vmem:[#allocation2 + $0x150] sm:$0xff]
    %v919 = vld [vmem:[#allocation2 + $0x158] sm:$0xff]
    %v920 = vld [vmem:[#allocation2 + $0x160] sm:$0xff]
    %v921 = vld [vmem:[#allocation2 + $0x168] sm:$0xff]
    %v922 = vld [vmem:[#allocation2 + $0x170] sm:$0xff]
    %v923 = vld [vmem:[#allocation2 + $0x178] sm:$0xff]
    %v924 = vld [vmem:[%s6] sm:$0x3]
    %v926 = vperm.slane %v924, 0
    %v927 = vperm.slane %v924, 1
    %v931 = vsel %vm414, %v710, 0
    %v934 = vsel %vm414, %v711, 0
    %v937 = vsel %vm414, %v712, 0
    %v940 = vsel %vm414, %v713, 0
    %v943 = vsel %vm414, %v714, 0
    %945 = vmatpush.msra.mxu0 %v906
    %946 = vmatpush.msra.mxu0 %v904
    %947 = vmatpush.msra.mxu0 %v902
    %948 = vmatpush.msra.mxu0 %v900
    %949 = vmatpush.msra.mxu0 %v898
    %950 = vmatpush.msra.mxu0 %v896
    %951 = vmatpush.msra.mxu0 %v894
    %952 = vmatpush.msra.mxu0 %v892
    %953 = vmatpush.msra.mxu0 %v890
    %954 = vmatpush.msra.mxu0 %v888
    %955 = vmatpush.msra.mxu0 %v886
    %956 = vmatpush.msra.mxu0 %v884
    %957 = vmatpush.msra.mxu0 %v882
    %958 = vmatpush.msra.mxu0 %v880
    %959 = vmatpush.msra.mxu0 %v878
    %960 = vmatpush.msra.mxu0 %v876
    %961 = vmatmul.f32.gmra.mxu0 %v871
    %v962 = vpop.f32.mrf.mxu0
    %v963 = vadd.f32 %v926, %v962
    %964 = vmatmul.f32.gmra.mxu0 %v872
    %v965 = vpop.f32.mrf.mxu0
    %v966 = vadd.f32 %v926, %v965
    %967 = vmatmul.f32.gmra.mxu0 %v873
    %v968 = vpop.f32.mrf.mxu0
    %v969 = vadd.f32 %v926, %v968
    %970 = vmatmul.f32.gmra.mxu0 %v874
    %v971 = vpop.f32.mrf.mxu0
    %v972 = vadd.f32 %v926, %v971
    %973 = vmatmul.f32.gmra.mxu0 %v875
    %v974 = vpop.f32.mrf.mxu0
    %v975 = vadd.f32 %v926, %v974
    %976 = vdwg.mxu0
    %977 = vmatpush.msra.mxu0 0.0
    %978 = vmatpush.msra.mxu0 0.0
    %979 = vmatpush.msra.mxu0 0.0
    %980 = vmatpush.msra.mxu0 0.0
    %981 = vmatpush.msra.mxu0 0.0
    %982 = vmatpush.msra.mxu0 0.0
    %983 = vmatpush.msra.mxu0 0.0
    %984 = vmatpush.msra.mxu0 0.0
    %985 = vmatpush.msra.mxu0 %v922
    %986 = vmatpush.msra.mxu0 %v920
    %987 = vmatpush.msra.mxu0 %v918
    %988 = vmatpush.msra.mxu0 %v916
    %989 = vmatpush.msra.mxu0 %v914
    %990 = vmatpush.msra.mxu0 %v912
    %991 = vmatpush.msra.mxu0 %v910
    %992 = vmatpush.msra.mxu0 %v908
    %993 = vmatmul.f32.gmra.mxu0 %v931
    %v994 = vpop.f32.mrf.mxu0
    %v995 = vadd.f32 %v963, %v994
    %996 = vmatmul.f32.gmra.mxu0 %v934
    %v997 = vpop.f32.mrf.mxu0
    %v998 = vadd.f32 %v966, %v997
    %999 = vmatmul.f32.gmra.mxu0 %v937
    %v1000 = vpop.f32.mrf.mxu0
    %v1001 = vadd.f32 %v969, %v1000
    %1002 = vmatmul.f32.gmra.mxu0 %v940
    %v1003 = vpop.f32.mrf.mxu0
    %v1004 = vadd.f32 %v972, %v1003
    %1005 = vmatmul.f32.gmra.mxu0 %v943
    %v1006 = vpop.f32.mrf.mxu0
    %v1007 = vadd.f32 %v975, %v1006
    %1008 = vdwg.mxu0
    %1009 = vmatpush.msra.mxu0 %v907
    %1010 = vmatpush.msra.mxu0 %v905
    %1011 = vmatpush.msra.mxu0 %v903
    %1012 = vmatpush.msra.mxu0 %v901
    %1013 = vmatpush.msra.mxu0 %v899
    %1014 = vmatpush.msra.mxu0 %v897
    %1015 = vmatpush.msra.mxu0 %v895
    %1016 = vmatpush.msra.mxu0 %v893
    %1017 = vmatpush.msra.mxu0 %v891
    %1018 = vmatpush.msra.mxu0 %v889
    %1019 = vmatpush.msra.mxu0 %v887
    %1020 = vmatpush.msra.mxu0 %v885
    %1021 = vmatpush.msra.mxu0 %v883
    %1022 = vmatpush.msra.mxu0 %v881
    %1023 = vmatpush.msra.mxu0 %v879
    %1024 = vmatpush.msra.mxu0 %v877
    %1025 = vmatmul.f32.gmra.mxu0 %v871
    %v1026 = vpop.f32.mrf.mxu0
    %v1027 = vadd.f32 %v927, %v1026
    %1028 = vmatmul.f32.gmra.mxu0 %v872
    %v1029 = vpop.f32.mrf.mxu0
    %v1030 = vadd.f32 %v927, %v1029
    %1031 = vmatmul.f32.gmra.mxu0 %v873
    %v1032 = vpop.f32.mrf.mxu0
    %v1033 = vadd.f32 %v927, %v1032
    %1034 = vmatmul.f32.gmra.mxu0 %v874
    %v1035 = vpop.f32.mrf.mxu0
    %v1036 = vadd.f32 %v927, %v1035
    %1037 = vmatmul.f32.gmra.mxu0 %v875
    %v1038 = vpop.f32.mrf.mxu0
    %v1039 = vadd.f32 %v927, %v1038
    %1040 = vdwg.mxu0
    %1041 = vmatpush.msra.mxu0 0.0
    %1042 = vmatpush.msra.mxu0 0.0
    %1043 = vmatpush.msra.mxu0 0.0
    %1044 = vmatpush.msra.mxu0 0.0
    %1045 = vmatpush.msra.mxu0 0.0
    %1046 = vmatpush.msra.mxu0 0.0
    %1047 = vmatpush.msra.mxu0 0.0
    %1048 = vmatpush.msra.mxu0 0.0
    %1049 = vmatpush.msra.mxu0 %v923
    %1050 = vmatpush.msra.mxu0 %v921
    %1051 = vmatpush.msra.mxu0 %v919
    %1052 = vmatpush.msra.mxu0 %v917
    %1053 = vmatpush.msra.mxu0 %v915
    %1054 = vmatpush.msra.mxu0 %v913
    %1055 = vmatpush.msra.mxu0 %v911
    %1056 = vmatpush.msra.mxu0 %v909
    %1057 = vmatmul.f32.gmra.mxu0 %v931
    %v1058 = vpop.f32.mrf.mxu0
    %v1059 = vadd.f32 %v1027, %v1058
    %1060 = vmatmul.f32.gmra.mxu0 %v934
    %v1061 = vpop.f32.mrf.mxu0
    %v1062 = vadd.f32 %v1030, %v1061
    %1063 = vmatmul.f32.gmra.mxu0 %v937
    %v1064 = vpop.f32.mrf.mxu0
    %v1065 = vadd.f32 %v1033, %v1064
    %1066 = vmatmul.f32.gmra.mxu0 %v940
    %v1067 = vpop.f32.mrf.mxu0
    %v1068 = vadd.f32 %v1036, %v1067
    %1069 = vmatmul.f32.gmra.mxu0 %v943
    %v1070 = vpop.f32.mrf.mxu0
    %v1071 = vadd.f32 %v1039, %v1070
    %1072 = vdwg.mxu0
    %v1073 = vtanh.pop %v995
    %v1074 = vtanh.pop %v1059
    %v1075 = vtanh.pop %v998
    %v1076 = vtanh.pop %v1062
    %v1077 = vtanh.pop %v1001
    %v1078 = vtanh.pop %v1065
    %v1079 = vtanh.pop %v1004
    %v1080 = vtanh.pop %v1068
    %v1081 = vtanh.pop %v1007
    %v1082 = vtanh.pop %v1071
    %v1083 = vld [vmem:[%s7] sm:$0xff]
    %v1084 = vld [vmem:[%s7 + $0x8] sm:$0xff]
    %v1085 = vld [vmem:[%s7 + $0x10] sm:$0xff]
    %v1086 = vld [vmem:[%s7 + $0x18] sm:$0xff]
    %v1087 = vld [vmem:[%s7 + $0x20] sm:$0xff]
    %v1088 = vld [vmem:[%s7 + $0x28] sm:$0xff]
    %v1089 = vld [vmem:[%s7 + $0x30] sm:$0xff]
    %v1090 = vld [vmem:[%s7 + $0x38] sm:$0xff]
    %v1091 = vld [vmem:[%s7 + $0x40] sm:$0xff]
    %v1092 = vld [vmem:[%s7 + $0x48] sm:$0xff]
    %v1093 = vld [vmem:[%s7 + $0x50] sm:$0xff]
    %v1094 = vld [vmem:[%s7 + $0x58] sm:$0xff]
    %v1095 = vld [vmem:[%s7 + $0x60] sm:$0xff]
    %v1096 = vld [vmem:[%s7 + $0x68] sm:$0xff]
    %v1097 = vld [vmem:[%s7 + $0x70] sm:$0xff]
    %v1098 = vld [vmem:[%s7 + $0x78] sm:$0xff]
    %v1099 = vld [vmem:[%s7 + $0x80] sm:$0xff]
    %v1100 = vld [vmem:[%s7 + $0x88] sm:$0xff]
    %v1101 = vld [vmem:[%s7 + $0x90] sm:$0xff]
    %v1102 = vld [vmem:[%s7 + $0x98] sm:$0xff]
    %v1103 = vld [vmem:[%s7 + $0xa0] sm:$0xff]
    %v1104 = vld [vmem:[%s7 + $0xa8] sm:$0xff]
    %v1105 = vld [vmem:[%s7 + $0xb0] sm:$0xff]
    %v1106 = vld [vmem:[%s7 + $0xb8] sm:$0xff]
    %v1107 = vld [vmem:[%s7 + $0xc0] sm:$0xff]
    %v1108 = vld [vmem:[%s7 + $0xc8] sm:$0xff]
    %v1109 = vld [vmem:[%s7 + $0xd0] sm:$0xff]
    %v1110 = vld [vmem:[%s7 + $0xd8] sm:$0xff]
    %v1111 = vld [vmem:[%s7 + $0xe0] sm:$0xff]
    %v1112 = vld [vmem:[%s7 + $0xe8] sm:$0xff]
    %v1113 = vld [vmem:[%s7 + $0xf0] sm:$0xff]
    %v1114 = vld [vmem:[%s7 + $0xf8] sm:$0xff]
    %v1115 = vld [vmem:[%s8] sm:$0x1]
    %v1117 = vperm.slane %v1115, 0
    %1119 = vmatpush.msra.mxu0 %v1098
    %1120 = vmatpush.msra.mxu0 %v1097
    %1121 = vmatpush.msra.mxu0 %v1096
    %1122 = vmatpush.msra.mxu0 %v1095
    %1123 = vmatpush.msra.mxu0 %v1094
    %1124 = vmatpush.msra.mxu0 %v1093
    %1125 = vmatpush.msra.mxu0 %v1092
    %1126 = vmatpush.msra.mxu0 %v1091
    %1127 = vmatpush.msra.mxu0 %v1090
    %1128 = vmatpush.msra.mxu0 %v1089
    %1129 = vmatpush.msra.mxu0 %v1088
    %1130 = vmatpush.msra.mxu0 %v1087
    %1131 = vmatpush.msra.mxu0 %v1086
    %1132 = vmatpush.msra.mxu0 %v1085
    %1133 = vmatpush.msra.mxu0 %v1084
    %1134 = vmatpush.msra.mxu0 %v1083
    %1135 = vmatmul.f32.gmra.mxu0 %v1073
    %v1136 = vpop.f32.mrf.mxu0
    %v1137 = vadd.f32 %v1117, %v1136
    %1138 = vmatmul.f32.gmra.mxu0 %v1075
    %v1139 = vpop.f32.mrf.mxu0
    %v1140 = vadd.f32 %v1117, %v1139
    %1141 = vmatmul.f32.gmra.mxu0 %v1077
    %v1142 = vpop.f32.mrf.mxu0
    %v1143 = vadd.f32 %v1117, %v1142
    %1144 = vmatmul.f32.gmra.mxu0 %v1079
    %v1145 = vpop.f32.mrf.mxu0
    %v1146 = vadd.f32 %v1117, %v1145
    %1147 = vmatmul.f32.gmra.mxu0 %v1081
    %v1148 = vpop.f32.mrf.mxu0
    %v1149 = vadd.f32 %v1117, %v1148
    %1150 = vdwg.mxu0
    %1151 = vmatpush.msra.mxu0 %v1114
    %1152 = vmatpush.msra.mxu0 %v1113
    %1153 = vmatpush.msra.mxu0 %v1112
    %1154 = vmatpush.msra.mxu0 %v1111
    %1155 = vmatpush.msra.mxu0 %v1110
    %1156 = vmatpush.msra.mxu0 %v1109
    %1157 = vmatpush.msra.mxu0 %v1108
    %1158 = vmatpush.msra.mxu0 %v1107
    %1159 = vmatpush.msra.mxu0 %v1106
    %1160 = vmatpush.msra.mxu0 %v1105
    %1161 = vmatpush.msra.mxu0 %v1104
    %1162 = vmatpush.msra.mxu0 %v1103
    %1163 = vmatpush.msra.mxu0 %v1102
    %1164 = vmatpush.msra.mxu0 %v1101
    %1165 = vmatpush.msra.mxu0 %v1100
    %1166 = vmatpush.msra.mxu0 %v1099
    %1167 = vmatmul.f32.gmra.mxu0 %v1074
    %v1168 = vpop.f32.mrf.mxu0
    %v1169 = vadd.f32 %v1137, %v1168
    %1170 = vmatmul.f32.gmra.mxu0 %v1076
    %v1171 = vpop.f32.mrf.mxu0
    %v1172 = vadd.f32 %v1140, %v1171
    %1173 = vmatmul.f32.gmra.mxu0 %v1078
    %v1174 = vpop.f32.mrf.mxu0
    %v1175 = vadd.f32 %v1143, %v1174
    %1176 = vmatmul.f32.gmra.mxu0 %v1080
    %v1177 = vpop.f32.mrf.mxu0
    %v1178 = vadd.f32 %v1146, %v1177
    %1179 = vmatmul.f32.gmra.mxu0 %v1082
    %v1180 = vpop.f32.mrf.mxu0
    %v1181 = vadd.f32 %v1149, %v1180
    %1182 = vdwg.mxu0
    %vm1183 = vcmp.gt.f32.partialorder %v1169, 0.0
    %vm1184 = vcmp.gt.f32.partialorder %v1172, 0.0
    %vm1185 = vcmp.gt.f32.partialorder %v1175, 0.0
    %vm1186 = vcmp.gt.f32.partialorder %v1178, 0.0
    %vm1187 = vcmp.gt.f32.partialorder %v1181, 0.0
    %v1188 = vmul.f32 %v1169, 0.01
    %v1189 = vmul.f32 %v1172, 0.01
    %v1190 = vmul.f32 %v1175, 0.01
    %v1191 = vmul.f32 %v1178, 0.01
    %v1192 = vmul.f32 %v1181, 0.01
    %v1193 = vsel %vm1183, %v1169, %v1188
    %v1194 = vsel %vm1184, %v1172, %v1189
    %v1195 = vsel %vm1185, %v1175, %v1190
    %v1196 = vsel %vm1186, %v1178, %v1191
    %v1197 = vsel %vm1187, %v1181, %v1192
    %v1198 = vmul.f32 %v1193, 1.442695
    %v1199 = vpow.pop %v1198
    %v1200 = vmul.f32 %v1194, 1.442695
    %v1201 = vpow.pop %v1200
    %v1202 = vmul.f32 %v1195, 1.442695
    %v1203 = vpow.pop %v1202
    %v1204 = vmul.f32 %v1196, 1.442695
    %v1205 = vpow.pop %v1204
    %v1206 = vmul.f32 %v1197, 1.442695
    %v1207 = vpow.pop %v1206
    %vm1208 = vcmp.gt.f32.partialorder %v65, 0.0
    %vm1209 = vcmp.gt.f32.partialorder %v66, 0.0
    %vm1210 = vcmp.gt.f32.partialorder %v67, 0.0
    %vm1211 = vcmp.gt.f32.partialorder %v68, 0.0
    %vm1212 = vcmp.gt.f32.partialorder %v69, 0.0
    %1218 = vrot.lane.b32.xlu0 %v1199, 126
    %v1219 = vpop.permute.xlu0 %1218
    %1220 = vrot.lane.b32.xlu0 %v1201, 126
    %v1221 = vpop.permute.xlu0 %1220
    %1222 = vrot.lane.b32.xlu0 %v1203, 126
    %v1223 = vpop.permute.xlu0 %1222
    %1224 = vrot.lane.b32.xlu0 %v1205, 126
    %v1225 = vpop.permute.xlu0 %1224
    %1226 = vrot.lane.b32.xlu0 %v1207, 126
    %v1227 = vpop.permute.xlu0 %1226
    %v1233 = vsel %vm1208, %v1199, %v1219
    %v1234 = vsel %vm1209, %v1201, %v1221
    %v1235 = vsel %vm1210, %v1203, %v1223
    %v1236 = vsel %vm1211, %v1205, %v1225
    %v1237 = vsel %vm1212, %v1207, %v1227
    %v1238 = vadd.f32 %v1233, 0.7
    %v1239 = vadd.f32 %v1234, 0.7
    %v1240 = vadd.f32 %v1235, 0.7
    %v1241 = vadd.f32 %v1236, 0.7
    %v1242 = vadd.f32 %v1237, 0.7
    %v1243 = vadd.f32 %v1233, 0.3
    %v1244 = vadd.f32 %v1234, 0.3
    %v1245 = vadd.f32 %v1235, 0.3
    %v1246 = vadd.f32 %v1236, 0.3
    %v1247 = vadd.f32 %v1237, 0.3
    %1253 = vrot.lane.b32.xlu0 %v1243, 127
    %v1254 = vpop.permute.xlu0 %1253
    %1255 = vrot.lane.b32.xlu0 %v1244, 127
    %v1256 = vpop.permute.xlu0 %1255
    %1257 = vrot.lane.b32.xlu0 %v1245, 127
    %v1258 = vpop.permute.xlu0 %1257
    %1259 = vrot.lane.b32.xlu0 %v1246, 127
    %v1260 = vpop.permute.xlu0 %1259
    %1261 = vrot.lane.b32.xlu0 %v1247, 127
    %v1262 = vpop.permute.xlu0 %1261
    %v1268 = vadd.f32 %v1238, %v1254
    %v1269 = vadd.f32 %v1239, %v1256
    %v1270 = vadd.f32 %v1240, %v1258
    %v1271 = vadd.f32 %v1241, %v1260
    %v1272 = vadd.f32 %v1242, %v1262
    %v1273 = vrcp.pop %v1268
    %v1274 = vmul.f32 %v1268, %v1273
    %v1275 = vsub.f32 1.0, %v1274
    %v1276 = vmul.f32 %v1273, %v1275
    %v1277 = vadd.f32 %v1273, %v1276
    %vm1278 = vweird.f32 %v1268
    %vm1279 = vweird.f32 %v1273
    %vm1280 = vmor %vm1278, %vm1279
    %v1281 = vsel %vm1280, %v1273, %v1277
    %v1282 = vand.u32 2147483647, %v1268
    %vm1283 = vcmp.eq.f32.partialorder %v1282, 8.507059e+37
    %v1284 = vand.u32 %v1268, 2147483648
    %v1285 = vor.u32 1.1754944e-38, %v1284
    %v1286 = vsel %vm1283, %v1285, %v1281
    %v1287 = vmul.f32 %v1238, %v1286
    %v1288 = vrcp.pop %v1269
    %v1289 = vmul.f32 %v1269, %v1288
    %v1290 = vsub.f32 1.0, %v1289
    %v1291 = vmul.f32 %v1288, %v1290
    %v1292 = vadd.f32 %v1288, %v1291
    %vm1293 = vweird.f32 %v1269
    %vm1294 = vweird.f32 %v1288
    %vm1295 = vmor %vm1293, %vm1294
    %v1296 = vsel %vm1295, %v1288, %v1292
    %v1297 = vand.u32 2147483647, %v1269
    %vm1298 = vcmp.eq.f32.partialorder %v1297, 8.507059e+37
    %v1299 = vand.u32 %v1269, 2147483648
    %v1300 = vor.u32 1.1754944e-38, %v1299
    %v1301 = vsel %vm1298, %v1300, %v1296
    %v1302 = vmul.f32 %v1239, %v1301
    %v1303 = vrcp.pop %v1270
    %v1304 = vmul.f32 %v1270, %v1303
    %v1305 = vsub.f32 1.0, %v1304
    %v1306 = vmul.f32 %v1303, %v1305
    %v1307 = vadd.f32 %v1303, %v1306
    %vm1308 = vweird.f32 %v1270
    %vm1309 = vweird.f32 %v1303
    %vm1310 = vmor %vm1308, %vm1309
    %v1311 = vsel %vm1310, %v1303, %v1307
    %v1312 = vand.u32 2147483647, %v1270
    %vm1313 = vcmp.eq.f32.partialorder %v1312, 8.507059e+37
    %v1314 = vand.u32 %v1270, 2147483648
    %v1315 = vor.u32 1.1754944e-38, %v1314
    %v1316 = vsel %vm1313, %v1315, %v1311
    %v1317 = vmul.f32 %v1240, %v1316
    %v1318 = vrcp.pop %v1271
    %v1319 = vmul.f32 %v1271, %v1318
    %v1320 = vsub.f32 1.0, %v1319
    %v1321 = vmul.f32 %v1318, %v1320
    %v1322 = vadd.f32 %v1318, %v1321
    %vm1323 = vweird.f32 %v1271
    %vm1324 = vweird.f32 %v1318
    %vm1325 = vmor %vm1323, %vm1324
    %v1326 = vsel %vm1325, %v1318, %v1322
    %v1327 = vand.u32 2147483647, %v1271
    %vm1328 = vcmp.eq.f32.partialorder %v1327, 8.507059e+37
    %v1329 = vand.u32 %v1271, 2147483648
    %v1330 = vor.u32 1.1754944e-38, %v1329
    %v1331 = vsel %vm1328, %v1330, %v1326
    %v1332 = vmul.f32 %v1241, %v1331
    %v1333 = vrcp.pop %v1272
    %v1334 = vmul.f32 %v1272, %v1333
    %v1335 = vsub.f32 1.0, %v1334
    %v1336 = vmul.f32 %v1333, %v1335
    %v1337 = vadd.f32 %v1333, %v1336
    %vm1338 = vweird.f32 %v1272
    %vm1339 = vweird.f32 %v1333
    %vm1340 = vmor %vm1338, %vm1339
    %v1341 = vsel %vm1340, %v1333, %v1337
    %v1342 = vand.u32 2147483647, %v1272
    %vm1343 = vcmp.eq.f32.partialorder %v1342, 8.507059e+37
    %v1344 = vand.u32 %v1272, 2147483648
    %v1345 = vor.u32 1.1754944e-38, %v1344
    %v1346 = vsel %vm1343, %v1345, %v1341
    %v1347 = vmul.f32 %v1242, %v1346
    %v1348 = vmul.f32 %v710, 0.5
    %v1349 = vmul.f32 %v711, 0.5
    %v1350 = vmul.f32 %v712, 0.5
    %v1351 = vmul.f32 %v713, 0.5
    %v1352 = vmul.f32 %v714, 0.5
    %v1353 = vmul.f32 %v846, 0.5
    %v1354 = vmul.f32 %v847, 0.5
    %v1355 = vmul.f32 %v848, 0.5
    %v1356 = vmul.f32 %v849, 0.5
    %v1357 = vmul.f32 %v850, 0.5
    %1359 = vset.pattern.permute.xlu0 0
    %1360 = vperm.xlu0 %1359, %v1287
    %v1361 = vpop.permute.xlu0 %1360
    %1364 = vset.pattern.permute.xlu0 0
    %1365 = vperm.xlu0 %1364, %v1302
    %v1366 = vpop.permute.xlu0 %1365
    %1369 = vset.pattern.permute.xlu0 0
    %1370 = vperm.xlu0 %1369, %v1317
    %v1371 = vpop.permute.xlu0 %1370
    %1374 = vset.pattern.permute.xlu0 0
    %1375 = vperm.xlu0 %1374, %v1332
    %v1376 = vpop.permute.xlu0 %1375
    %1379 = vset.pattern.permute.xlu0 0
    %1380 = vperm.xlu0 %1379, %v1347
    %v1381 = vpop.permute.xlu0 %1380
    %v1383 = vmul.f32 %v1353, %v1361
    %v1384 = vmul.f32 %v1354, %v1366
    %v1385 = vmul.f32 %v1355, %v1371
    %v1386 = vmul.f32 %v1356, %v1376
    %v1387 = vmul.f32 %v1357, %v1381
    %v1388 = vadd.f32 %v1348, %v1383
    %v1389 = vadd.f32 %v1349, %v1384
    %v1390 = vadd.f32 %v1350, %v1385
    %v1391 = vadd.f32 %v1351, %v1386
    %v1392 = vadd.f32 %v1352, %v1387
    %v1393 = vpack.c.bf16 %v1389, %v1388
    %v1394 = vpack.c.bf16 %v1391, %v1390
    %v1395 = vpack.c.bf16 %v1392, %v1392
    %v1397 = vsel %vm746, %v1395, 0
    %1399 = vmatpush.bf16.msra.mxu0 0
    %1400 = vmatpush.bf16.msra.mxu0 0
    %1401 = vmatpush.bf16.msra.mxu0 0
    %1402 = vmatpush.bf16.msra.mxu0 0
    %1403 = vmatpush.bf16.msra.mxu0 0
    %1404 = vmatpush.bf16.msra.mxu0 %v1397
    %1405 = vmatpush.bf16.msra.mxu0 %v1394
    %1406 = vmatpush.bf16.msra.mxu0 %v1393
    %1407 = vmatmul.bf16.gmra.mxu0 %v738
    %v1408 = vpop.f32.mrf.mxu0
    %v1409 = vadd.f32 0.0, %v1408
    %v1410 = vpop.f32.mrf.mxu0
    %v1411 = vadd.f32 0.0, %v1410
    %1412 = vmatmul.bf16.gmra.mxu0 %v741
    %v1413 = vpop.f32.mrf.mxu0
    %v1414 = vadd.f32 0.0, %v1413
    %v1415 = vpop.f32.mrf.mxu0
    %v1416 = vadd.f32 0.0, %v1415
    %1417 = vmatmul.bf16.gmra.mxu0 %v744
    %v1418 = vpop.f32.mrf.mxu0
    %v1419 = vadd.f32 0.0, %v1418
    %v1420 = vpop.f32.mrf.mxu0
    %1421 = vdwg.mxu0
    %v1422 = vadd.f32 %v1388, %v1409
    %v1423 = vadd.f32 %v1389, %v1411
    %v1424 = vadd.f32 %v1390, %v1414
    %v1425 = vadd.f32 %v1391, %v1416
    %v1426 = vadd.f32 %v1392, %v1419
    %v1427 = vpack.c.bf16 %v1411, %v1409
    %v1428 = vpack.c.bf16 %v1416, %v1414
    %v1429 = vpack.c.bf16 %v1419, %v1419
    %v1431 = vsel %vm746, %v1429, 0
    %1433 = vmatpush.bf16.msra.mxu0 0
    %1434 = vmatpush.bf16.msra.mxu0 0
    %1435 = vmatpush.bf16.msra.mxu0 0
    %1436 = vmatpush.bf16.msra.mxu0 0
    %1437 = vmatpush.bf16.msra.mxu0 0
    %1438 = vmatpush.bf16.msra.mxu0 %v1431
    %1439 = vmatpush.bf16.msra.mxu0 %v1428
    %1440 = vmatpush.bf16.msra.mxu0 %v1427
    %1441 = vmatmul.bf16.gmra.mxu0 %v738
    %v1442 = vpop.f32.mrf.mxu0
    %v1443 = vadd.f32 0.0, %v1442
    %v1444 = vpop.f32.mrf.mxu0
    %v1445 = vadd.f32 0.0, %v1444
    %1446 = vmatmul.bf16.gmra.mxu0 %v741
    %v1447 = vpop.f32.mrf.mxu0
    %v1448 = vadd.f32 0.0, %v1447
    %v1449 = vpop.f32.mrf.mxu0
    %v1450 = vadd.f32 0.0, %v1449
    %1451 = vmatmul.bf16.gmra.mxu0 %v744
    %v1452 = vpop.f32.mrf.mxu0
    %v1453 = vadd.f32 0.0, %v1452
    %v1454 = vpop.f32.mrf.mxu0
    %1455 = vdwg.mxu0
    %v1456 = vadd.f32 %v1422, %v1443
    %v1457 = vadd.f32 %v1423, %v1445
    %v1458 = vadd.f32 %v1424, %v1448
    %v1459 = vadd.f32 %v1425, %v1450
    %v1460 = vadd.f32 %v1426, %v1453
    %v1461 = vpack.c.bf16 %v1445, %v1443
    %v1462 = vpack.c.bf16 %v1450, %v1448
    %v1463 = vpack.c.bf16 %v1453, %v1453
    %v1465 = vsel %vm746, %v1463, 0
    %1467 = vmatpush.bf16.msra.mxu0 0
    %1468 = vmatpush.bf16.msra.mxu0 0
    %1469 = vmatpush.bf16.msra.mxu0 0
    %1470 = vmatpush.bf16.msra.mxu0 0
    %1471 = vmatpush.bf16.msra.mxu0 0
    %1472 = vmatpush.bf16.msra.mxu0 %v1465
    %1473 = vmatpush.bf16.msra.mxu0 %v1462
    %1474 = vmatpush.bf16.msra.mxu0 %v1461
    %1475 = vmatmul.bf16.gmra.mxu0 %v738
    %v1476 = vpop.f32.mrf.mxu0
    %v1477 = vadd.f32 0.0, %v1476
    %v1478 = vpop.f32.mrf.mxu0
    %v1479 = vadd.f32 0.0, %v1478
    %1480 = vmatmul.bf16.gmra.mxu0 %v741
    %v1481 = vpop.f32.mrf.mxu0
    %v1482 = vadd.f32 0.0, %v1481
    %v1483 = vpop.f32.mrf.mxu0
    %v1484 = vadd.f32 0.0, %v1483
    %1485 = vmatmul.bf16.gmra.mxu0 %v744
    %v1486 = vpop.f32.mrf.mxu0
    %v1487 = vadd.f32 0.0, %v1486
    %v1488 = vpop.f32.mrf.mxu0
    %1489 = vdwg.mxu0
    %v1490 = vadd.f32 %v1456, %v1477
    %v1491 = vadd.f32 %v1457, %v1479
    %v1492 = vadd.f32 %v1458, %v1482
    %v1493 = vadd.f32 %v1459, %v1484
    %v1494 = vadd.f32 %v1460, %v1487
    %v1495 = vmul.f32 %v1490, 0.25
    %v1496 = vmul.f32 %v1491, 0.25
    %v1497 = vmul.f32 %v1492, 0.25
    %v1498 = vmul.f32 %v1493, 0.25
    %v1499 = vmul.f32 %v1494, 0.25
    %1505 = vrot.lane.b32.xlu0 %v1495, 64
    %v1506 = vpop.permute.xlu0 %1505
    %1507 = vrot.lane.b32.xlu0 %v1496, 64
    %v1508 = vpop.permute.xlu0 %1507
    %1509 = vrot.lane.b32.xlu0 %v1497, 64
    %v1510 = vpop.permute.xlu0 %1509
    %1511 = vrot.lane.b32.xlu0 %v1498, 64
    %v1512 = vpop.permute.xlu0 %1511
    %1513 = vrot.lane.b32.xlu0 %v1499, 64
    %v1514 = vpop.permute.xlu0 %1513
    %v1520 = vsel %vm414, %v1388, %v1506
    %v1521 = vsel %vm414, %v1389, %v1508
    %v1522 = vsel %vm414, %v1390, %v1510
    %v1523 = vsel %vm414, %v1391, %v1512
    %v1524 = vsel %vm414, %v1392, %v1514
    %s1525 = scalar_lea.vmem [#allocation2], 384
    %v1526 = vld [vmem:[%s1525] sm:$0xff]
    %v1527 = vld [vmem:[%s1525 + $0x8] sm:$0xff]
    %v1528 = vld [vmem:[%s1525 + $0x10] sm:$0xff]
    %v1529 = vld [vmem:[%s1525 + $0x18] sm:$0xff]
    %v1530 = vld [vmem:[%s1525 + $0x20] sm:$0xff]
    %v1531 = vld [vmem:[%s1525 + $0x28] sm:$0xff]
    %v1532 = vld [vmem:[%s1525 + $0x30] sm:$0xff]
    %v1533 = vld [vmem:[%s1525 + $0x38] sm:$0xff]
    %v1534 = vld [vmem:[%s1525 + $0x40] sm:$0xff]
    %v1535 = vld [vmem:[%s1525 + $0x48] sm:$0xff]
    %v1536 = vld [vmem:[%s1525 + $0x50] sm:$0xff]
    %v1537 = vld [vmem:[%s1525 + $0x58] sm:$0xff]
    %v1538 = vld [vmem:[%s1525 + $0x60] sm:$0xff]
    %v1539 = vld [vmem:[%s1525 + $0x68] sm:$0xff]
    %v1540 = vld [vmem:[%s1525 + $0x70] sm:$0xff]
    %v1541 = vld [vmem:[%s1525 + $0x78] sm:$0xff]
    %v1542 = vld [vmem:[%s1525 + $0x80] sm:$0xff]
    %v1543 = vld [vmem:[%s1525 + $0x88] sm:$0xff]
    %v1544 = vld [vmem:[%s1525 + $0x90] sm:$0xff]
    %v1545 = vld [vmem:[%s1525 + $0x98] sm:$0xff]
    %v1546 = vld [vmem:[%s1525 + $0xa0] sm:$0xff]
    %v1547 = vld [vmem:[%s1525 + $0xa8] sm:$0xff]
    %v1548 = vld [vmem:[%s1525 + $0xb0] sm:$0xff]
    %v1549 = vld [vmem:[%s1525 + $0xb8] sm:$0xff]
    %v1550 = vld [vmem:[%s1525 + $0xc0] sm:$0xff]
    %v1551 = vld [vmem:[%s1525 + $0xc8] sm:$0xff]
    %v1552 = vld [vmem:[%s1525 + $0xd0] sm:$0xff]
    %v1553 = vld [vmem:[%s1525 + $0xd8] sm:$0xff]
    %v1554 = vld [vmem:[%s1525 + $0xe0] sm:$0xff]
    %v1555 = vld [vmem:[%s1525 + $0xe8] sm:$0xff]
    %v1556 = vld [vmem:[%s1525 + $0xf0] sm:$0xff]
    %v1557 = vld [vmem:[%s1525 + $0xf8] sm:$0xff]
    %v1558 = vld [vmem:[%s1525 + $0x100] sm:$0xff]
    %v1559 = vld [vmem:[%s1525 + $0x108] sm:$0xff]
    %v1560 = vld [vmem:[%s1525 + $0x110] sm:$0xff]
    %v1561 = vld [vmem:[%s1525 + $0x118] sm:$0xff]
    %v1562 = vld [vmem:[%s1525 + $0x120] sm:$0xff]
    %v1563 = vld [vmem:[%s1525 + $0x128] sm:$0xff]
    %v1564 = vld [vmem:[%s1525 + $0x130] sm:$0xff]
    %v1565 = vld [vmem:[%s1525 + $0x138] sm:$0xff]
    %v1566 = vld [vmem:[%s1525 + $0x140] sm:$0xff]
    %v1567 = vld [vmem:[%s1525 + $0x148] sm:$0xff]
    %v1568 = vld [vmem:[%s1525 + $0x150] sm:$0xff]
    %v1569 = vld [vmem:[%s1525 + $0x158] sm:$0xff]
    %v1570 = vld [vmem:[%s1525 + $0x160] sm:$0xff]
    %v1571 = vld [vmem:[%s1525 + $0x168] sm:$0xff]
    %v1572 = vld [vmem:[%s1525 + $0x170] sm:$0xff]
    %v1573 = vld [vmem:[%s1525 + $0x178] sm:$0xff]
    %s1574 = scalar_lea.vmem %s6, 2
    %v1575 = vld [vmem:[%s1574] sm:$0x3]
    %v1577 = vperm.slane %v1575, 0
    %v1578 = vperm.slane %v1575, 1
    %v1582 = vsel %vm414, %v1388, 0
    %v1585 = vsel %vm414, %v1389, 0
    %v1588 = vsel %vm414, %v1390, 0
    %v1591 = vsel %vm414, %v1391, 0
    %v1594 = vsel %vm414, %v1392, 0
    %1596 = vmatpush.msra.mxu0 %v1556
    %1597 = vmatpush.msra.mxu0 %v1554
    %1598 = vmatpush.msra.mxu0 %v1552
    %1599 = vmatpush.msra.mxu0 %v1550
    %1600 = vmatpush.msra.mxu0 %v1548
    %1601 = vmatpush.msra.mxu0 %v1546
    %1602 = vmatpush.msra.mxu0 %v1544
    %1603 = vmatpush.msra.mxu0 %v1542
    %1604 = vmatpush.msra.mxu0 %v1540
    %1605 = vmatpush.msra.mxu0 %v1538
    %1606 = vmatpush.msra.mxu0 %v1536
    %1607 = vmatpush.msra.mxu0 %v1534
    %1608 = vmatpush.msra.mxu0 %v1532
    %1609 = vmatpush.msra.mxu0 %v1530
    %1610 = vmatpush.msra.mxu0 %v1528
    %1611 = vmatpush.msra.mxu0 %v1526
    %1612 = vmatmul.f32.gmra.mxu0 %v1520
    %v1613 = vpop.f32.mrf.mxu0
    %v1614 = vadd.f32 %v1577, %v1613
    %1615 = vmatmul.f32.gmra.mxu0 %v1521
    %v1616 = vpop.f32.mrf.mxu0
    %v1617 = vadd.f32 %v1577, %v1616
    %1618 = vmatmul.f32.gmra.mxu0 %v1522
    %v1619 = vpop.f32.mrf.mxu0
    %v1620 = vadd.f32 %v1577, %v1619
    %1621 = vmatmul.f32.gmra.mxu0 %v1523
    %v1622 = vpop.f32.mrf.mxu0
    %v1623 = vadd.f32 %v1577, %v1622
    %1624 = vmatmul.f32.gmra.mxu0 %v1524
    %v1625 = vpop.f32.mrf.mxu0
    %v1626 = vadd.f32 %v1577, %v1625
    %1627 = vdwg.mxu0
    %1628 = vmatpush.msra.mxu0 0.0
    %1629 = vmatpush.msra.mxu0 0.0
    %1630 = vmatpush.msra.mxu0 0.0
    %1631 = vmatpush.msra.mxu0 0.0
    %1632 = vmatpush.msra.mxu0 0.0
    %1633 = vmatpush.msra.mxu0 0.0
    %1634 = vmatpush.msra.mxu0 0.0
    %1635 = vmatpush.msra.mxu0 0.0
    %1636 = vmatpush.msra.mxu0 %v1572
    %1637 = vmatpush.msra.mxu0 %v1570
    %1638 = vmatpush.msra.mxu0 %v1568
    %1639 = vmatpush.msra.mxu0 %v1566
    %1640 = vmatpush.msra.mxu0 %v1564
    %1641 = vmatpush.msra.mxu0 %v1562
    %1642 = vmatpush.msra.mxu0 %v1560
    %1643 = vmatpush.msra.mxu0 %v1558
    %1644 = vmatmul.f32.gmra.mxu0 %v1582
    %v1645 = vpop.f32.mrf.mxu0
    %v1646 = vadd.f32 %v1614, %v1645
    %1647 = vmatmul.f32.gmra.mxu0 %v1585
    %v1648 = vpop.f32.mrf.mxu0
    %v1649 = vadd.f32 %v1617, %v1648
    %1650 = vmatmul.f32.gmra.mxu0 %v1588
    %v1651 = vpop.f32.mrf.mxu0
    %v1652 = vadd.f32 %v1620, %v1651
    %1653 = vmatmul.f32.gmra.mxu0 %v1591
    %v1654 = vpop.f32.mrf.mxu0
    %v1655 = vadd.f32 %v1623, %v1654
    %1656 = vmatmul.f32.gmra.mxu0 %v1594
    %v1657 = vpop.f32.mrf.mxu0
    %v1658 = vadd.f32 %v1626, %v1657
    %1659 = vdwg.mxu0
    %1660 = vmatpush.msra.mxu0 %v1557
    %1661 = vmatpush.msra.mxu0 %v1555
    %1662 = vmatpush.msra.mxu0 %v1553
    %1663 = vmatpush.msra.mxu0 %v1551
    %1664 = vmatpush.msra.mxu0 %v1549
    %1665 = vmatpush.msra.mxu0 %v1547
    %1666 = vmatpush.msra.mxu0 %v1545
    %1667 = vmatpush.msra.mxu0 %v1543
    %1668 = vmatpush.msra.mxu0 %v1541
    %1669 = vmatpush.msra.mxu0 %v1539
    %1670 = vmatpush.msra.mxu0 %v1537
    %1671 = vmatpush.msra.mxu0 %v1535
    %1672 = vmatpush.msra.mxu0 %v1533
    %1673 = vmatpush.msra.mxu0 %v1531
    %1674 = vmatpush.msra.mxu0 %v1529
    %1675 = vmatpush.msra.mxu0 %v1527
    %1676 = vmatmul.f32.gmra.mxu0 %v1520
    %v1677 = vpop.f32.mrf.mxu0
    %v1678 = vadd.f32 %v1578, %v1677
    %1679 = vmatmul.f32.gmra.mxu0 %v1521
    %v1680 = vpop.f32.mrf.mxu0
    %v1681 = vadd.f32 %v1578, %v1680
    %1682 = vmatmul.f32.gmra.mxu0 %v1522
    %v1683 = vpop.f32.mrf.mxu0
    %v1684 = vadd.f32 %v1578, %v1683
    %1685 = vmatmul.f32.gmra.mxu0 %v1523
    %v1686 = vpop.f32.mrf.mxu0
    %v1687 = vadd.f32 %v1578, %v1686
    %1688 = vmatmul.f32.gmra.mxu0 %v1524
    %v1689 = vpop.f32.mrf.mxu0
    %v1690 = vadd.f32 %v1578, %v1689
    %1691 = vdwg.mxu0
    %1692 = vmatpush.msra.mxu0 0.0
    %1693 = vmatpush.msra.mxu0 0.0
    %1694 = vmatpush.msra.mxu0 0.0
    %1695 = vmatpush.msra.mxu0 0.0
    %1696 = vmatpush.msra.mxu0 0.0
    %1697 = vmatpush.msra.mxu0 0.0
    %1698 = vmatpush.msra.mxu0 0.0
    %1699 = vmatpush.msra.mxu0 0.0
    %1700 = vmatpush.msra.mxu0 %v1573
    %1701 = vmatpush.msra.mxu0 %v1571
    %1702 = vmatpush.msra.mxu0 %v1569
    %1703 = vmatpush.msra.mxu0 %v1567
    %1704 = vmatpush.msra.mxu0 %v1565
    %1705 = vmatpush.msra.mxu0 %v1563
    %1706 = vmatpush.msra.mxu0 %v1561
    %1707 = vmatpush.msra.mxu0 %v1559
    %1708 = vmatmul.f32.gmra.mxu0 %v1582
    %v1709 = vpop.f32.mrf.mxu0
    %v1710 = vadd.f32 %v1678, %v1709
    %1711 = vmatmul.f32.gmra.mxu0 %v1585
    %v1712 = vpop.f32.mrf.mxu0
    %v1713 = vadd.f32 %v1681, %v1712
    %1714 = vmatmul.f32.gmra.mxu0 %v1588
    %v1715 = vpop.f32.mrf.mxu0
    %v1716 = vadd.f32 %v1684, %v1715
    %1717 = vmatmul.f32.gmra.mxu0 %v1591
    %v1718 = vpop.f32.mrf.mxu0
    %v1719 = vadd.f32 %v1687, %v1718
    %1720 = vmatmul.f32.gmra.mxu0 %v1594
    %v1721 = vpop.f32.mrf.mxu0
    %v1722 = vadd.f32 %v1690, %v1721
    %1723 = vdwg.mxu0
    %v1724 = vtanh.pop %v1646
    %v1725 = vtanh.pop %v1710
    %v1726 = vtanh.pop %v1649
    %v1727 = vtanh.pop %v1713
    %v1728 = vtanh.pop %v1652
    %v1729 = vtanh.pop %v1716
    %v1730 = vtanh.pop %v1655
    %v1731 = vtanh.pop %v1719
    %v1732 = vtanh.pop %v1658
    %v1733 = vtanh.pop %v1722
    %s1734 = scalar_lea.vmem %s7, 256
    %v1735 = vld [vmem:[%s1734] sm:$0xff]
    %v1736 = vld [vmem:[%s1734 + $0x8] sm:$0xff]
    %v1737 = vld [vmem:[%s1734 + $0x10] sm:$0xff]
    %v1738 = vld [vmem:[%s1734 + $0x18] sm:$0xff]
    %v1739 = vld [vmem:[%s1734 + $0x20] sm:$0xff]
    %v1740 = vld [vmem:[%s1734 + $0x28] sm:$0xff]
    %v1741 = vld [vmem:[%s1734 + $0x30] sm:$0xff]
    %v1742 = vld [vmem:[%s1734 + $0x38] sm:$0xff]
    %v1743 = vld [vmem:[%s1734 + $0x40] sm:$0xff]
    %v1744 = vld [vmem:[%s1734 + $0x48] sm:$0xff]
    %v1745 = vld [vmem:[%s1734 + $0x50] sm:$0xff]
    %v1746 = vld [vmem:[%s1734 + $0x58] sm:$0xff]
    %v1747 = vld [vmem:[%s1734 + $0x60] sm:$0xff]
    %v1748 = vld [vmem:[%s1734 + $0x68] sm:$0xff]
    %v1749 = vld [vmem:[%s1734 + $0x70] sm:$0xff]
    %v1750 = vld [vmem:[%s1734 + $0x78] sm:$0xff]
    %v1751 = vld [vmem:[%s1734 + $0x80] sm:$0xff]
    %v1752 = vld [vmem:[%s1734 + $0x88] sm:$0xff]
    %v1753 = vld [vmem:[%s1734 + $0x90] sm:$0xff]
    %v1754 = vld [vmem:[%s1734 + $0x98] sm:$0xff]
    %v1755 = vld [vmem:[%s1734 + $0xa0] sm:$0xff]
    %v1756 = vld [vmem:[%s1734 + $0xa8] sm:$0xff]
    %v1757 = vld [vmem:[%s1734 + $0xb0] sm:$0xff]
    %v1758 = vld [vmem:[%s1734 + $0xb8] sm:$0xff]
    %v1759 = vld [vmem:[%s1734 + $0xc0] sm:$0xff]
    %v1760 = vld [vmem:[%s1734 + $0xc8] sm:$0xff]
    %v1761 = vld [vmem:[%s1734 + $0xd0] sm:$0xff]
    %v1762 = vld [vmem:[%s1734 + $0xd8] sm:$0xff]
    %v1763 = vld [vmem:[%s1734 + $0xe0] sm:$0xff]
    %v1764 = vld [vmem:[%s1734 + $0xe8] sm:$0xff]
    %v1765 = vld [vmem:[%s1734 + $0xf0] sm:$0xff]
    %v1766 = vld [vmem:[%s1734 + $0xf8] sm:$0xff]
    %s1767 = scalar_lea.vmem %s8, 1
    %v1768 = vld [vmem:[%s1767] sm:$0x1]
    %v1770 = vperm.slane %v1768, 0
    %1772 = vmatpush.msra.mxu0 %v1750
    %1773 = vmatpush.msra.mxu0 %v1749
    %1774 = vmatpush.msra.mxu0 %v1748
    %1775 = vmatpush.msra.mxu0 %v1747
    %1776 = vmatpush.msra.mxu0 %v1746
    %1777 = vmatpush.msra.mxu0 %v1745
    %1778 = vmatpush.msra.mxu0 %v1744
    %1779 = vmatpush.msra.mxu0 %v1743
    %1780 = vmatpush.msra.mxu0 %v1742
    %1781 = vmatpush.msra.mxu0 %v1741
    %1782 = vmatpush.msra.mxu0 %v1740
    %1783 = vmatpush.msra.mxu0 %v1739
    %1784 = vmatpush.msra.mxu0 %v1738
    %1785 = vmatpush.msra.mxu0 %v1737
    %1786 = vmatpush.msra.mxu0 %v1736
    %1787 = vmatpush.msra.mxu0 %v1735
    %1788 = vmatmul.f32.gmra.mxu0 %v1724
    %v1789 = vpop.f32.mrf.mxu0
    %v1790 = vadd.f32 %v1770, %v1789
    %1791 = vmatmul.f32.gmra.mxu0 %v1726
    %v1792 = vpop.f32.mrf.mxu0
    %v1793 = vadd.f32 %v1770, %v1792
    %1794 = vmatmul.f32.gmra.mxu0 %v1728
    %v1795 = vpop.f32.mrf.mxu0
    %v1796 = vadd.f32 %v1770, %v1795
    %1797 = vmatmul.f32.gmra.mxu0 %v1730
    %v1798 = vpop.f32.mrf.mxu0
    %v1799 = vadd.f32 %v1770, %v1798
    %1800 = vmatmul.f32.gmra.mxu0 %v1732
    %v1801 = vpop.f32.mrf.mxu0
    %v1802 = vadd.f32 %v1770, %v1801
    %1803 = vdwg.mxu0
    %1804 = vmatpush.msra.mxu0 %v1766
    %1805 = vmatpush.msra.mxu0 %v1765
    %1806 = vmatpush.msra.mxu0 %v1764
    %1807 = vmatpush.msra.mxu0 %v1763
    %1808 = vmatpush.msra.mxu0 %v1762
    %1809 = vmatpush.msra.mxu0 %v1761
    %1810 = vmatpush.msra.mxu0 %v1760
    %1811 = vmatpush.msra.mxu0 %v1759
    %1812 = vmatpush.msra.mxu0 %v1758
    %1813 = vmatpush.msra.mxu0 %v1757
    %1814 = vmatpush.msra.mxu0 %v1756
    %1815 = vmatpush.msra.mxu0 %v1755
    %1816 = vmatpush.msra.mxu0 %v1754
    %1817 = vmatpush.msra.mxu0 %v1753
    %1818 = vmatpush.msra.mxu0 %v1752
    %1819 = vmatpush.msra.mxu0 %v1751
    %1820 = vmatmul.f32.gmra.mxu0 %v1725
    %v1821 = vpop.f32.mrf.mxu0
    %v1822 = vadd.f32 %v1790, %v1821
    %1823 = vmatmul.f32.gmra.mxu0 %v1727
    %v1824 = vpop.f32.mrf.mxu0
    %v1825 = vadd.f32 %v1793, %v1824
    %1826 = vmatmul.f32.gmra.mxu0 %v1729
    %v1827 = vpop.f32.mrf.mxu0
    %v1828 = vadd.f32 %v1796, %v1827
    %1829 = vmatmul.f32.gmra.mxu0 %v1731
    %v1830 = vpop.f32.mrf.mxu0
    %v1831 = vadd.f32 %v1799, %v1830
    %1832 = vmatmul.f32.gmra.mxu0 %v1733
    %v1833 = vpop.f32.mrf.mxu0
    %v1834 = vadd.f32 %v1802, %v1833
    %1835 = vdwg.mxu0
    %vm1836 = vcmp.gt.f32.partialorder %v1822, 0.0
    %vm1837 = vcmp.gt.f32.partialorder %v1825, 0.0
    %vm1838 = vcmp.gt.f32.partialorder %v1828, 0.0
    %vm1839 = vcmp.gt.f32.partialorder %v1831, 0.0
    %vm1840 = vcmp.gt.f32.partialorder %v1834, 0.0
    %v1841 = vmul.f32 %v1822, 0.01
    %v1842 = vmul.f32 %v1825, 0.01
    %v1843 = vmul.f32 %v1828, 0.01
    %v1844 = vmul.f32 %v1831, 0.01
    %v1845 = vmul.f32 %v1834, 0.01
    %v1846 = vsel %vm1836, %v1822, %v1841
    %v1847 = vsel %vm1837, %v1825, %v1842
    %v1848 = vsel %vm1838, %v1828, %v1843
    %v1849 = vsel %vm1839, %v1831, %v1844
    %v1850 = vsel %vm1840, %v1834, %v1845
    %v1851 = vmul.f32 %v1846, 1.442695
    %v1852 = vpow.pop %v1851
    %v1853 = vmul.f32 %v1847, 1.442695
    %v1854 = vpow.pop %v1853
    %v1855 = vmul.f32 %v1848, 1.442695
    %v1856 = vpow.pop %v1855
    %v1857 = vmul.f32 %v1849, 1.442695
    %v1858 = vpow.pop %v1857
    %v1859 = vmul.f32 %v1850, 1.442695
    %v1860 = vpow.pop %v1859
    %1866 = vrot.lane.b32.xlu0 %v1852, 126
    %v1867 = vpop.permute.xlu0 %1866
    %1868 = vrot.lane.b32.xlu0 %v1854, 126
    %v1869 = vpop.permute.xlu0 %1868
    %1870 = vrot.lane.b32.xlu0 %v1856, 126
    %v1871 = vpop.permute.xlu0 %1870
    %1872 = vrot.lane.b32.xlu0 %v1858, 126
    %v1873 = vpop.permute.xlu0 %1872
    %1874 = vrot.lane.b32.xlu0 %v1860, 126
    %v1875 = vpop.permute.xlu0 %1874
    %v1881 = vsel %vm1208, %v1852, %v1867
    %v1882 = vsel %vm1209, %v1854, %v1869
    %v1883 = vsel %vm1210, %v1856, %v1871
    %v1884 = vsel %vm1211, %v1858, %v1873
    %v1885 = vsel %vm1212, %v1860, %v1875
    %v1886 = vadd.f32 %v1881, 0.7
    %v1887 = vadd.f32 %v1882, 0.7
    %v1888 = vadd.f32 %v1883, 0.7
    %v1889 = vadd.f32 %v1884, 0.7
    %v1890 = vadd.f32 %v1885, 0.7
    %v1891 = vadd.f32 %v1881, 0.3
    %v1892 = vadd.f32 %v1882, 0.3
    %v1893 = vadd.f32 %v1883, 0.3
    %v1894 = vadd.f32 %v1884, 0.3
    %v1895 = vadd.f32 %v1885, 0.3
    %1901 = vrot.lane.b32.xlu0 %v1891, 127
    %v1902 = vpop.permute.xlu0 %1901
    %1903 = vrot.lane.b32.xlu0 %v1892, 127
    %v1904 = vpop.permute.xlu0 %1903
    %1905 = vrot.lane.b32.xlu0 %v1893, 127
    %v1906 = vpop.permute.xlu0 %1905
    %1907 = vrot.lane.b32.xlu0 %v1894, 127
    %v1908 = vpop.permute.xlu0 %1907
    %1909 = vrot.lane.b32.xlu0 %v1895, 127
    %v1910 = vpop.permute.xlu0 %1909
    %v1916 = vadd.f32 %v1886, %v1902
    %v1917 = vadd.f32 %v1887, %v1904
    %v1918 = vadd.f32 %v1888, %v1906
    %v1919 = vadd.f32 %v1889, %v1908
    %v1920 = vadd.f32 %v1890, %v1910
    %v1921 = vrcp.pop %v1916
    %v1922 = vmul.f32 %v1916, %v1921
    %v1923 = vsub.f32 1.0, %v1922
    %v1924 = vmul.f32 %v1921, %v1923
    %v1925 = vadd.f32 %v1921, %v1924
    %vm1926 = vweird.f32 %v1916
    %vm1927 = vweird.f32 %v1921
    %vm1928 = vmor %vm1926, %vm1927
    %v1929 = vsel %vm1928, %v1921, %v1925
    %v1930 = vand.u32 2147483647, %v1916
    %vm1931 = vcmp.eq.f32.partialorder %v1930, 8.507059e+37
    %v1932 = vand.u32 %v1916, 2147483648
    %v1933 = vor.u32 1.1754944e-38, %v1932
    %v1934 = vsel %vm1931, %v1933, %v1929
    %v1935 = vmul.f32 %v1886, %v1934
    %v1936 = vrcp.pop %v1917
    %v1937 = vmul.f32 %v1917, %v1936
    %v1938 = vsub.f32 1.0, %v1937
    %v1939 = vmul.f32 %v1936, %v1938
    %v1940 = vadd.f32 %v1936, %v1939
    %vm1941 = vweird.f32 %v1917
    %vm1942 = vweird.f32 %v1936
    %vm1943 = vmor %vm1941, %vm1942
    %v1944 = vsel %vm1943, %v1936, %v1940
    %v1945 = vand.u32 2147483647, %v1917
    %vm1946 = vcmp.eq.f32.partialorder %v1945, 8.507059e+37
    %v1947 = vand.u32 %v1917, 2147483648
    %v1948 = vor.u32 1.1754944e-38, %v1947
    %v1949 = vsel %vm1946, %v1948, %v1944
    %v1950 = vmul.f32 %v1887, %v1949
    %v1951 = vrcp.pop %v1918
    %v1952 = vmul.f32 %v1918, %v1951
    %v1953 = vsub.f32 1.0, %v1952
    %v1954 = vmul.f32 %v1951, %v1953
    %v1955 = vadd.f32 %v1951, %v1954
    %vm1956 = vweird.f32 %v1918
    %vm1957 = vweird.f32 %v1951
    %vm1958 = vmor %vm1956, %vm1957
    %v1959 = vsel %vm1958, %v1951, %v1955
    %v1960 = vand.u32 2147483647, %v1918
    %vm1961 = vcmp.eq.f32.partialorder %v1960, 8.507059e+37
    %v1962 = vand.u32 %v1918, 2147483648
    %v1963 = vor.u32 1.1754944e-38, %v1962
    %v1964 = vsel %vm1961, %v1963, %v1959
    %v1965 = vmul.f32 %v1888, %v1964
    %v1966 = vrcp.pop %v1919
    %v1967 = vmul.f32 %v1919, %v1966
    %v1968 = vsub.f32 1.0, %v1967
    %v1969 = vmul.f32 %v1966, %v1968
    %v1970 = vadd.f32 %v1966, %v1969
    %vm1971 = vweird.f32 %v1919
    %vm1972 = vweird.f32 %v1966
    %vm1973 = vmor %vm1971, %vm1972
    %v1974 = vsel %vm1973, %v1966, %v1970
    %v1975 = vand.u32 2147483647, %v1919
    %vm1976 = vcmp.eq.f32.partialorder %v1975, 8.507059e+37
    %v1977 = vand.u32 %v1919, 2147483648
    %v1978 = vor.u32 1.1754944e-38, %v1977
    %v1979 = vsel %vm1976, %v1978, %v1974
    %v1980 = vmul.f32 %v1889, %v1979
    %v1981 = vrcp.pop %v1920
    %v1982 = vmul.f32 %v1920, %v1981
    %v1983 = vsub.f32 1.0, %v1982
    %v1984 = vmul.f32 %v1981, %v1983
    %v1985 = vadd.f32 %v1981, %v1984
    %vm1986 = vweird.f32 %v1920
    %vm1987 = vweird.f32 %v1981
    %vm1988 = vmor %vm1986, %vm1987
    %v1989 = vsel %vm1988, %v1981, %v1985
    %v1990 = vand.u32 2147483647, %v1920
    %vm1991 = vcmp.eq.f32.partialorder %v1990, 8.507059e+37
    %v1992 = vand.u32 %v1920, 2147483648
    %v1993 = vor.u32 1.1754944e-38, %v1992
    %v1994 = vsel %vm1991, %v1993, %v1989
    %v1995 = vmul.f32 %v1890, %v1994
    %v1996 = vmul.f32 %v1388, 0.5
    %v1997 = vmul.f32 %v1389, 0.5
    %v1998 = vmul.f32 %v1390, 0.5
    %v1999 = vmul.f32 %v1391, 0.5
    %v2000 = vmul.f32 %v1392, 0.5
    %v2001 = vmul.f32 %v1495, 0.5
    %v2002 = vmul.f32 %v1496, 0.5
    %v2003 = vmul.f32 %v1497, 0.5
    %v2004 = vmul.f32 %v1498, 0.5
    %v2005 = vmul.f32 %v1499, 0.5
    %2007 = vset.pattern.permute.xlu0 0
    %2008 = vperm.xlu0 %2007, %v1935
    %v2009 = vpop.permute.xlu0 %2008
    %2012 = vset.pattern.permute.xlu0 0
    %2013 = vperm.xlu0 %2012, %v1950
    %v2014 = vpop.permute.xlu0 %2013
    %2017 = vset.pattern.permute.xlu0 0
    %2018 = vperm.xlu0 %2017, %v1965
    %v2019 = vpop.permute.xlu0 %2018
    %2022 = vset.pattern.permute.xlu0 0
    %2023 = vperm.xlu0 %2022, %v1980
    %v2024 = vpop.permute.xlu0 %2023
    %2027 = vset.pattern.permute.xlu0 0
    %2028 = vperm.xlu0 %2027, %v1995
    %v2029 = vpop.permute.xlu0 %2028
    %v2031 = vmul.f32 %v2001, %v2009
    %v2032 = vmul.f32 %v2002, %v2014
    %v2033 = vmul.f32 %v2003, %v2019
    %v2034 = vmul.f32 %v2004, %v2024
    %v2035 = vmul.f32 %v2005, %v2029
    %v2036 = vadd.f32 %v1996, %v2031
    %v2037 = vadd.f32 %v1997, %v2032
    %v2038 = vadd.f32 %v1998, %v2033
    %v2039 = vadd.f32 %v1999, %v2034
    %v2040 = vadd.f32 %v2000, %v2035
    %2046 = vrot.lane.b32.xlu0 %v644, 64
    %v2047 = vpop.permute.xlu0 %2046
    %2048 = vrot.lane.b32.xlu0 %v659, 64
    %v2049 = vpop.permute.xlu0 %2048
    %2050 = vrot.lane.b32.xlu0 %v674, 64
    %v2051 = vpop.permute.xlu0 %2050
    %2052 = vrot.lane.b32.xlu0 %v689, 64
    %v2053 = vpop.permute.xlu0 %2052
    %2054 = vrot.lane.b32.xlu0 %v704, 64
    %v2055 = vpop.permute.xlu0 %2054
    %2066 = vrot.lane.b32.xlu0 %v2036, 64
    %v2067 = vpop.permute.xlu0 %2066
    %2068 = vrot.lane.b32.xlu0 %v2037, 64
    %v2069 = vpop.permute.xlu0 %2068
    %2070 = vrot.lane.b32.xlu0 %v2038, 64
    %v2071 = vpop.permute.xlu0 %2070
    %2072 = vrot.lane.b32.xlu0 %v2039, 64
    %v2073 = vpop.permute.xlu0 %2072
    %2074 = vrot.lane.b32.xlu0 %v2040, 64
    %v2075 = vpop.permute.xlu0 %2074
    %v2081 = vsel %vm414, %v705, %v2047
    %v2082 = vsel %vm414, %v706, %v2049
    %v2083 = vsel %vm414, %v707, %v2051
    %v2084 = vsel %vm414, %v708, %v2053
    %v2085 = vsel %vm414, %v709, %v2055
    %v2086 = vsel %vm414, %v1388, %v2067
    %v2087 = vsel %vm414, %v1389, %v2069
    %v2088 = vsel %vm414, %v1390, %v2071
    %v2089 = vsel %vm414, %v1391, %v2073
    %v2090 = vsel %vm414, %v1392, %v2075
    %2091 = vst [vmem:[%s9] sm:$0xff] %v2081
    %2092 = vst [vmem:[%s9 + $0x8] sm:$0xff] %v2086
    %2093 = vst [vmem:[%s9 + $0x10] sm:$0xff] %v2082
    %2094 = vst [vmem:[%s9 + $0x18] sm:$0xff] %v2087
    %2095 = vst [vmem:[%s9 + $0x20] sm:$0xff] %v2083
    %2096 = vst [vmem:[%s9 + $0x28] sm:$0xff] %v2088
    %2097 = vst [vmem:[%s9 + $0x30] sm:$0xff] %v2084
    %2098 = vst [vmem:[%s9 + $0x38] sm:$0xff] %v2089
    %2099 = vst [vmem:[%s9 + $0x40] sm:$0xff] %v2085
    %2100 = vst [vmem:[%s9 + $0x48] sm:$0xff] %v2090
    // Predicated region
    $region42: #{forward.2} parent=1 // pred_check
      _
    $region43: #{forward.2} parent=1 // pred_check_branch
      %2102 = sbr.rel (0) target = $region45
    $region44: #{forward.2} parent=1 // pred_region
      _
    $region45: #{forward.2} parent=1 // pred_fallthru
      _
    // Predicated region
    $region46: #{forward.2} parent=1 // pred_check
      _
    $region47: #{forward.2} parent=1 // pred_check_branch
      %2104 = sbr.rel (0) target = $region49
    $region48: #{forward.2} parent=1 // pred_region
      _
    $region49: #{forward.2} parent=1 // pred_fallthru
      _
    %2105 = vsyncpa [#allocation3], 1

</llo_original>
